<compile_context>
chip_gen: v7x
topology: tpu7x:2x2x1
jax: 0.10.0
libtpu: 0.0.40
codegen_flags: <defaults>
</compile_context>

<pallas_src>
import jax
import jax.numpy as jnp
from jax.experimental import pallas as pl
from jax.experimental.pallas import tpu as pltpu


# ----------------------------- config (small, synthetic) -----------------------------
BATCH = 2
SEQ = 8
HIDDEN = 128
NUM_HEADS = 4
NUM_KV_HEADS = 2
HEAD_DIM = HIDDEN // NUM_HEADS          # 32
N_REP = NUM_HEADS // NUM_KV_HEADS       # num_key_value_groups
HALF = HEAD_DIM // 2                    # 16
QH = NUM_HEADS * HALF                   # 64   (all q first-half lanes)
KH = NUM_KV_HEADS * HALF                # 32   (all k first-half lanes)
QK_HALF_W = QH + KH                     # 96   (one rotate-half slab width)
QK_W = 2 * QK_HALF_W                    # 192  (q+k width in the fused QKV output)
V_OFF = QK_W                            # v columns start here
QKV_DIM = QK_W + NUM_KV_HEADS * HEAD_DIM  # 256 (lane-dense fused QKV width)
SCALING = HEAD_DIM ** -0.5
ROPE_THETA = 10000.0
DTYPE = jnp.float32


# ----------------------------- fused Pallas kernel -----------------------------
def _fused_attn_kernel(x_ref, wqkv_ref, wo_ref, cos_ref, sin_ref, o_ref, attn_ref):
    """x [B*S,HIDDEN] f32; wqkv [HIDDEN,QKV_DIM] bf16 (cols = [q1|k1|q2|k2|v],
    scaling folded into q); wo [Hq*D,HIDDEN] bf16; cos/sin [B*S,QK_W] f32
    (pre-tiled to slab width); o [B*S,HIDDEN]; attn_ref VMEM scratch [B*S,Hq*D] f32."""
    # --- fused QKV projection for ALL tokens: one bf16 MXU matmul, fp32 accum ---
    x = x_ref[...].astype(jnp.bfloat16)
    qkv = jnp.dot(x, wqkv_ref[...], preferred_element_type=jnp.float32)   # [BS, QKV_DIM]

    # --- slab RoPE (fp32, purely elementwise, once for all heads & batches) ---
    # layout: slab1 = all first halves [q|k], slab2 = all second halves [q|k]
    slab1 = qkv[:, :QK_HALF_W]
    slab2 = qkv[:, QK_HALF_W:QK_W]
    cos_a = cos_ref[:, :QK_HALF_W]
    cos_b = cos_ref[:, QK_HALF_W:]
    sin_a = sin_ref[:, :QK_HALF_W]
    sin_b = sin_ref[:, QK_HALF_W:]
    rot1 = slab1 * cos_a - slab2 * sin_a      # rotated first halves  (q heads, then k heads)
    rot2 = slab2 * cos_b + slab1 * sin_b      # rotated second halves (q heads, then k heads)

    # --- GQA attention per batch / kv-head (static, fully unrolled: B=2, Hkv=2) ---
    # TODO(synk): at realistic head counts (e.g. 32q/8kv) replace these static
    # Python loops with lax.fori_loop / a grid axis to bound vreg live ranges.
    for b in range(BATCH):
        r0 = b * SEQ
        for g in range(NUM_KV_HEADS):
            k1 = rot1[r0:r0 + SEQ, QH + g * HALF: QH + (g + 1) * HALF].astype(jnp.bfloat16)
            k2 = rot2[r0:r0 + SEQ, QH + g * HALF: QH + (g + 1) * HALF].astype(jnp.bfloat16)
            v_g = qkv[r0:r0 + SEQ,
                      V_OFF + g * HEAD_DIM: V_OFF + (g + 1) * HEAD_DIM].astype(jnp.bfloat16)
            for rr in range(N_REP):                       # query heads sharing this KV head
                h = g * N_REP + rr
                q1 = rot1[r0:r0 + SEQ, h * HALF:(h + 1) * HALF].astype(jnp.bfloat16)
                q2 = rot2[r0:r0 + SEQ, h * HALF:(h + 1) * HALF].astype(jnp.bfloat16)
                # scores with RoPE folded in: q_rot @ k_rot.T = q1@k1.T + q2@k2.T
                # (head_dim^-0.5 already folded into the q weight columns)
                s = (jnp.dot(q1, k1.T, preferred_element_type=jnp.float32)
                     + jnp.dot(q2, k2.T, preferred_element_type=jnp.float32))
                # fp32 softmax (matches eager_attention_forward)
                s = s - jnp.max(s, axis=-1, keepdims=True)
                p = jnp.exp(s)
                p = p * pl.reciprocal(jnp.sum(p, axis=-1, keepdims=True), approx=True)
                o_h = jnp.dot(p.astype(jnp.bfloat16), v_g,
                              preferred_element_type=jnp.float32)          # [S, D]
                # stage into the merged-output VMEM scratch at lane offset h*D
                attn_ref[r0:r0 + SEQ, h * HEAD_DIM:(h + 1) * HEAD_DIM] = o_h

    # --- single merged output projection: [BS, Hq*D] @ [Hq*D, HIDDEN] ---
    attn = attn_ref[...].astype(jnp.bfloat16)
    out = jnp.dot(attn, wo_ref[...], preferred_element_type=jnp.float32)
    o_ref[...] = out.astype(o_ref.dtype)                  # lane-dense [BS, HIDDEN] store


# ----------------------------- one-time weight / table prep -----------------------------
def prepare_params(params):
    """torch [out,in] layouts -> fused, column-permuted, transposed, bf16, scale folded."""
    wq = params["wq"] * SCALING                     # fold head_dim^-0.5 into q (RoPE is linear)
    wk, wv, wo = params["wk"], params["wv"], params["wo"]
    q3 = wq.reshape(NUM_HEADS, HEAD_DIM, HIDDEN)
    k3 = wk.reshape(NUM_KV_HEADS, HEAD_DIM, HIDDEN)
    q1 = q3[:, :HALF, :].reshape(QH, HIDDEN)        # all q first-half rows, head-major
    q2 = q3[:, HALF:, :].reshape(QH, HIDDEN)
    k1 = k3[:, :HALF, :].reshape(KH, HIDDEN)
    k2 = k3[:, HALF:, :].reshape(KH, HIDDEN)
    wqkv_t = jnp.concatenate([q1, k1, q2, k2, wv], axis=0).T.astype(jnp.bfloat16)
    wo_t = wo.T.astype(jnp.bfloat16)
    return {"wqkv_t": wqkv_t, "wo_t": wo_t}


def build_rope_tables(cos, sin, batch):
    """cos/sin [S, D] -> slab-width tables [B*S, QK_W] matching the [q1|k1 || q2|k2] layout."""
    n_heads_total = NUM_HEADS + NUM_KV_HEADS
    cos_a = jnp.tile(cos[:, :HALF], (1, n_heads_total))      # first-half cos, per head
    cos_b = jnp.tile(cos[:, HALF:], (1, n_heads_total))      # second-half cos, per head
    sin_a = jnp.tile(sin[:, :HALF], (1, n_heads_total))
    sin_b = jnp.tile(sin[:, HALF:], (1, n_heads_total))
    rope_cos = jnp.tile(jnp.concatenate([cos_a, cos_b], axis=1), (batch, 1))
    rope_sin = jnp.tile(jnp.concatenate([sin_a, sin_b], axis=1), (batch, 1))
    return rope_cos.astype(jnp.float32), rope_sin.astype(jnp.float32)


# ----------------------------- wrapper -----------------------------
def llama_attention_forward(hidden_states, cos, sin, fused):
    """hidden_states: [B, S, HIDDEN]; cos/sin: [S, HEAD_DIM] (shared across batch)."""
    B, S, H = hidden_states.shape
    x2d = hidden_states.reshape(B * S, H)                     # lane-dense token slab
    rope_cos, rope_sin = build_rope_tables(cos, sin, B)
    wqkv_t, wo_t = fused["wqkv_t"], fused["wo_t"]
    # TODO(synk): past_key_value cache update, attention_mask / causal masking,
    # and attention dropout (training) paths are not implemented.
    out2d = pl.pallas_call(
        _fused_attn_kernel,
        out_shape=jax.ShapeDtypeStruct((B * S, H), hidden_states.dtype),
        grid=(1,),                                            # single fused invocation
        in_specs=[
            pl.BlockSpec((B * S, H), lambda i: (0, 0)),       # all tokens at once
            pl.BlockSpec(wqkv_t.shape, lambda i: (0, 0)),     # fused QKV weight (bf16, resident)
            pl.BlockSpec(wo_t.shape, lambda i: (0, 0)),       # output-proj weight (bf16, resident)
            pl.BlockSpec(rope_cos.shape, lambda i: (0, 0)),   # slab-tiled cos table
            pl.BlockSpec(rope_sin.shape, lambda i: (0, 0)),   # slab-tiled sin table
        ],
        out_specs=pl.BlockSpec((B * S, H), lambda i: (0, 0)),
        scratch_shapes=[pltpu.VMEM((B * S, NUM_HEADS * HEAD_DIM), jnp.float32)],
    )(x2d, wqkv_t, wo_t, rope_cos, rope_sin)
    return out2d.reshape(B, S, H)


# ----------------------------- pure-JAX reference (fp32, eager semantics) -----------------------------
def reference_forward(x, cos, sin, params):
    B, S, H = x.shape
    q = (x @ params["wq"].T).reshape(B, S, NUM_HEADS, HEAD_DIM).transpose(0, 2, 1, 3)
    k = (x @ params["wk"].T).reshape(B, S, NUM_KV_HEADS, HEAD_DIM).transpose(0, 2, 1, 3)
    v = (x @ params["wv"].T).reshape(B, S, NUM_KV_HEADS, HEAD_DIM).transpose(0, 2, 1, 3)

    def rot(t):
        d = t.shape[-1] // 2
        return jnp.concatenate([-t[..., d:], t[..., :d]], axis=-1)

    ce, se = cos[None, None], sin[None, None]
    q = q * ce + rot(q) * se
    k = k * ce + rot(k) * se
    k = jnp.repeat(k, N_REP, axis=1)
    v = jnp.repeat(v, N_REP, axis=1)
    s = jnp.einsum("bhqd,bhkd->bhqk", q, k) * SCALING
    p = jax.nn.softmax(s.astype(jnp.float32), axis=-1).astype(q.dtype)
    o = jnp.einsum("bhqk,bhkd->bhqd", p, v)
    o = o.transpose(0, 2, 1, 3).reshape(B, S, NUM_HEADS * HEAD_DIM)
    return o @ params["wo"].T


# ----------------------------- main -----------------------------
if __name__ == "__main__":
    key = jax.random.PRNGKey(0)
    kx, kq, kk, kv, ko = jax.random.split(key, 5)

    scale = 0.02
    params = {
        # torch nn.Linear weight layout: [out_features, in_features]
        "wq": scale * jax.random.normal(kq, (NUM_HEADS * HEAD_DIM, HIDDEN), DTYPE),
        "wk": scale * jax.random.normal(kk, (NUM_KV_HEADS * HEAD_DIM, HIDDEN), DTYPE),
        "wv": scale * jax.random.normal(kv, (NUM_KV_HEADS * HEAD_DIM, HIDDEN), DTYPE),
        "wo": scale * jax.random.normal(ko, (HIDDEN, NUM_HEADS * HEAD_DIM), DTYPE),
    }

    hidden_states = jax.random.normal(kx, (BATCH, SEQ, HIDDEN), DTYPE)

    # Default Llama rotary embedding tables (shared across batch -> [S, D]).
    inv_freq = 1.0 / (ROPE_THETA ** (jnp.arange(0, HEAD_DIM, 2, dtype=jnp.float32) / HEAD_DIM))
    positions = jnp.arange(SEQ, dtype=jnp.float32)
    freqs = positions[:, None] * inv_freq[None, :]            # [S, D/2]
    emb = jnp.concatenate([freqs, freqs], axis=-1)            # [S, D]
    cos = jnp.cos(emb).astype(DTYPE)
    sin = jnp.sin(emb).astype(DTYPE)

    fused = prepare_params(params)                            # one-time weight transform
    out = llama_attention_forward(hidden_states, cos, sin, fused)
    out = jax.block_until_ready(out)

    ref = reference_forward(hidden_states, cos, sin, params)
    assert out.shape == (BATCH, SEQ, HIDDEN)
    # bf16 MXU operands (fp32 accumulation) + approx reciprocal in the softmax
    # -> looser tolerance than an fp32-exact kernel.
    assert jnp.allclose(out, ref, atol=1e-2, rtol=2e-2), "mismatch vs pure-JAX reference"

    print("KERNEL_OK")
</pallas_src>

<mosaic_0001>
module attributes {stable_mosaic.version = 11 : i64} {
  func.func @_fused_attn_kernel(%arg0: i32, %arg1: memref<16x128xf32, #tpu.memory_space<vmem>>, %arg2: memref<128x256xbf16, #tpu.memory_space<vmem>>, %arg3: memref<128x128xbf16, #tpu.memory_space<vmem>>, %arg4: memref<16x192xf32, #tpu.memory_space<vmem>>, %arg5: memref<16x192xf32, #tpu.memory_space<vmem>>, %arg6: memref<16x128xf32, #tpu.memory_space<vmem>>, %arg7: memref<16x128xf32, #tpu.memory_space<vmem>>) attributes {dimension_semantics = [#tpu.dimension_semantics<arbitrary>], iteration_bounds = array<i64: 1>, scalar_prefetch = 0 : i64, scratch_operands = 1 : i64, tpu.core_type = #tpu.core_type<tc>, window_params = [{pipeline_mode = #tpu.pipeline_mode<synchronous>, transform_indices = @transform_0, window_bounds = array<i64: 16, 128>}, {pipeline_mode = #tpu.pipeline_mode<synchronous>, transform_indices = @transform_1, window_bounds = array<i64: 128, 256>}, {pipeline_mode = #tpu.pipeline_mode<synchronous>, transform_indices = @transform_2, window_bounds = array<i64: 128, 128>}, {pipeline_mode = #tpu.pipeline_mode<synchronous>, transform_indices = @transform_3, window_bounds = array<i64: 16, 192>}, {pipeline_mode = #tpu.pipeline_mode<synchronous>, transform_indices = @transform_4, window_bounds = array<i64: 16, 192>}, {pipeline_mode = #tpu.pipeline_mode<synchronous>, transform_indices = @transform_5, window_bounds = array<i64: 16, 128>}]} {
    %c0 = arith.constant 0 : index
    %c0_0 = arith.constant 0 : index
    %0 = vector.load %arg1[%c0, %c0_0] : memref<16x128xf32, #tpu.memory_space<vmem>>, vector<16x128xf32>
    %1 = arith.truncf %0 : vector<16x128xf32> to vector<16x128xbf16>
    %c0_1 = arith.constant 0 : index
    %c0_2 = arith.constant 0 : index
    %2 = vector.load %arg2[%c0_1, %c0_2] : memref<128x256xbf16, #tpu.memory_space<vmem>>, vector<128x256xbf16>
    %cst = arith.constant dense<0.000000e+00> : vector<16x256xf32>
    %3 = tpu.matmul %1, %2, %cst {dimension_numbers = #tpu.dot_dimension_numbers<[1], [0], [0], [1], [0, 0, 1, 1], [], []>} : vector<16x128xbf16>, vector<128x256xbf16>, vector<16x256xf32> -> vector<16x256xf32>
    %4 = vector.extract_strided_slice %3 {offsets = [0, 0], sizes = [16, 96], strides = [1, 1]} : vector<16x256xf32> to vector<16x96xf32>
    %5 = vector.extract_strided_slice %3 {offsets = [0, 96], sizes = [16, 96], strides = [1, 1]} : vector<16x256xf32> to vector<16x96xf32>
    %c0_3 = arith.constant 0 : index
    %c0_4 = arith.constant 0 : index
    %6 = vector.load %arg4[%c0_3, %c0_4] : memref<16x192xf32, #tpu.memory_space<vmem>>, vector<16x96xf32>
    %c0_5 = arith.constant 0 : index
    %c96 = arith.constant 96 : index
    %7 = vector.load %arg4[%c0_5, %c96] : memref<16x192xf32, #tpu.memory_space<vmem>>, vector<16x96xf32>
    %c0_6 = arith.constant 0 : index
    %c0_7 = arith.constant 0 : index
    %8 = vector.load %arg5[%c0_6, %c0_7] : memref<16x192xf32, #tpu.memory_space<vmem>>, vector<16x96xf32>
    %c0_8 = arith.constant 0 : index
    %c96_9 = arith.constant 96 : index
    %9 = vector.load %arg5[%c0_8, %c96_9] : memref<16x192xf32, #tpu.memory_space<vmem>>, vector<16x96xf32>
    %10 = arith.mulf %4, %6 : vector<16x96xf32>
    %11 = arith.mulf %5, %8 : vector<16x96xf32>
    %12 = arith.subf %10, %11 : vector<16x96xf32>
    %13 = arith.mulf %5, %7 : vector<16x96xf32>
    %14 = arith.mulf %4, %9 : vector<16x96xf32>
    %15 = arith.addf %13, %14 : vector<16x96xf32>
    %16 = vector.extract_strided_slice %12 {offsets = [0, 64], sizes = [8, 16], strides = [1, 1]} : vector<16x96xf32> to vector<8x16xf32>
    %17 = arith.truncf %16 : vector<8x16xf32> to vector<8x16xbf16>
    %18 = vector.extract_strided_slice %15 {offsets = [0, 64], sizes = [8, 16], strides = [1, 1]} : vector<16x96xf32> to vector<8x16xf32>
    %19 = arith.truncf %18 : vector<8x16xf32> to vector<8x16xbf16>
    %20 = vector.extract_strided_slice %3 {offsets = [0, 192], sizes = [8, 32], strides = [1, 1]} : vector<16x256xf32> to vector<8x32xf32>
    %21 = arith.truncf %20 : vector<8x32xf32> to vector<8x32xbf16>
    %22 = vector.extract_strided_slice %12 {offsets = [0, 0], sizes = [8, 16], strides = [1, 1]} : vector<16x96xf32> to vector<8x16xf32>
    %23 = arith.truncf %22 : vector<8x16xf32> to vector<8x16xbf16>
    %24 = vector.extract_strided_slice %15 {offsets = [0, 0], sizes = [8, 16], strides = [1, 1]} : vector<16x96xf32> to vector<8x16xf32>
    %25 = arith.truncf %24 : vector<8x16xf32> to vector<8x16xbf16>
    %26 = tpu.transpose %17, [1, 0] : vector<8x16xbf16> -> vector<16x8xbf16>
    %cst_10 = arith.constant dense<0.000000e+00> : vector<8x8xf32>
    %27 = tpu.matmul %23, %26, %cst_10 {dimension_numbers = #tpu.dot_dimension_numbers<[1], [0], [0], [1], [0, 0, 1, 1], [], []>} : vector<8x16xbf16>, vector<16x8xbf16>, vector<8x8xf32> -> vector<8x8xf32>
    %28 = tpu.transpose %19, [1, 0] : vector<8x16xbf16> -> vector<16x8xbf16>
    %cst_11 = arith.constant dense<0.000000e+00> : vector<8x8xf32>
    %29 = tpu.matmul %25, %28, %cst_11 {dimension_numbers = #tpu.dot_dimension_numbers<[1], [0], [0], [1], [0, 0, 1, 1], [], []>} : vector<8x16xbf16>, vector<16x8xbf16>, vector<8x8xf32> -> vector<8x8xf32>
    %30 = arith.addf %27, %29 : vector<8x8xf32>
    %cst_12 = arith.constant dense<0xFF800000> : vector<8xf32>
    %31 = vector.multi_reduction <maximumf>, %30, %cst_12 [1] : vector<8x8xf32> to vector<8xf32>
    %32 = vector.shape_cast %31 : vector<8xf32> to vector<8x1xf32>
    %33 = vector.broadcast %32 : vector<8x1xf32> to vector<8x8xf32>
    %34 = arith.subf %30, %33 : vector<8x8xf32>
    %35 = math.exp %34 : vector<8x8xf32>
    %cst_13 = arith.constant dense<0.000000e+00> : vector<8xf32>
    %36 = vector.multi_reduction <add>, %35, %cst_13 [1] : vector<8x8xf32> to vector<8xf32>
    %37 = vector.shape_cast %36 : vector<8xf32> to vector<8x1xf32>
    %38 = tpu.reciprocal %37 {approx = true} : vector<8x1xf32> -> vector<8x1xf32>
    %39 = vector.broadcast %38 : vector<8x1xf32> to vector<8x8xf32>
    %40 = arith.mulf %35, %39 : vector<8x8xf32>
    %41 = arith.truncf %40 : vector<8x8xf32> to vector<8x8xbf16>
    %cst_14 = arith.constant dense<0.000000e+00> : vector<8x32xf32>
    %42 = tpu.matmul %41, %21, %cst_14 {dimension_numbers = #tpu.dot_dimension_numbers<[1], [0], [0], [1], [0, 0, 1, 1], [], []>} : vector<8x8xbf16>, vector<8x32xbf16>, vector<8x32xf32> -> vector<8x32xf32>
    %c0_15 = arith.constant 0 : index
    %c0_16 = arith.constant 0 : index
    %43 = vector.load %arg7[%c0_15, %c0_16] : memref<16x128xf32, #tpu.memory_space<vmem>>, vector<8x32xf32>
    tpu.vector_store %arg7[%c0_15, %c0_16], %42 {strides = array<i32>} : memref<16x128xf32, #tpu.memory_space<vmem>>, vector<8x32xf32>,
    %44 = vector.extract_strided_slice %12 {offsets = [0, 16], sizes = [8, 16], strides = [1, 1]} : vector<16x96xf32> to vector<8x16xf32>
    %45 = arith.truncf %44 : vector<8x16xf32> to vector<8x16xbf16>
    %46 = vector.extract_strided_slice %15 {offsets = [0, 16], sizes = [8, 16], strides = [1, 1]} : vector<16x96xf32> to vector<8x16xf32>
    %47 = arith.truncf %46 : vector<8x16xf32> to vector<8x16xbf16>
    %48 = tpu.transpose %17, [1, 0] : vector<8x16xbf16> -> vector<16x8xbf16>
    %cst_17 = arith.constant dense<0.000000e+00> : vector<8x8xf32>
    %49 = tpu.matmul %45, %48, %cst_17 {dimension_numbers = #tpu.dot_dimension_numbers<[1], [0], [0], [1], [0, 0, 1, 1], [], []>} : vector<8x16xbf16>, vector<16x8xbf16>, vector<8x8xf32> -> vector<8x8xf32>
    %50 = tpu.transpose %19, [1, 0] : vector<8x16xbf16> -> vector<16x8xbf16>
    %cst_18 = arith.constant dense<0.000000e+00> : vector<8x8xf32>
    %51 = tpu.matmul %47, %50, %cst_18 {dimension_numbers = #tpu.dot_dimension_numbers<[1], [0], [0], [1], [0, 0, 1, 1], [], []>} : vector<8x16xbf16>, vector<16x8xbf16>, vector<8x8xf32> -> vector<8x8xf32>
    %52 = arith.addf %49, %51 : vector<8x8xf32>
    %cst_19 = arith.constant dense<0xFF800000> : vector<8xf32>
    %53 = vector.multi_reduction <maximumf>, %52, %cst_19 [1] : vector<8x8xf32> to vector<8xf32>
    %54 = vector.shape_cast %53 : vector<8xf32> to vector<8x1xf32>
    %55 = vector.broadcast %54 : vector<8x1xf32> to vector<8x8xf32>
    %56 = arith.subf %52, %55 : vector<8x8xf32>
    %57 = math.exp %56 : vector<8x8xf32>
    %cst_20 = arith.constant dense<0.000000e+00> : vector<8xf32>
    %58 = vector.multi_reduction <add>, %57, %cst_20 [1] : vector<8x8xf32> to vector<8xf32>
    %59 = vector.shape_cast %58 : vector<8xf32> to vector<8x1xf32>
    %60 = tpu.reciprocal %59 {approx = true} : vector<8x1xf32> -> vector<8x1xf32>
    %61 = vector.broadcast %60 : vector<8x1xf32> to vector<8x8xf32>
    %62 = arith.mulf %57, %61 : vector<8x8xf32>
    %63 = arith.truncf %62 : vector<8x8xf32> to vector<8x8xbf16>
    %cst_21 = arith.constant dense<0.000000e+00> : vector<8x32xf32>
    %64 = tpu.matmul %63, %21, %cst_21 {dimension_numbers = #tpu.dot_dimension_numbers<[1], [0], [0], [1], [0, 0, 1, 1], [], []>} : vector<8x8xbf16>, vector<8x32xbf16>, vector<8x32xf32> -> vector<8x32xf32>
    %c0_22 = arith.constant 0 : index
    %c32 = arith.constant 32 : index
    %65 = vector.load %arg7[%c0_22, %c32] : memref<16x128xf32, #tpu.memory_space<vmem>>, vector<8x32xf32>
    tpu.vector_store %arg7[%c0_22, %c32], %64 {strides = array<i32>} : memref<16x128xf32, #tpu.memory_space<vmem>>, vector<8x32xf32>,
    %66 = vector.extract_strided_slice %12 {offsets = [0, 80], sizes = [8, 16], strides = [1, 1]} : vector<16x96xf32> to vector<8x16xf32>
    %67 = arith.truncf %66 : vector<8x16xf32> to vector<8x16xbf16>
    %68 = vector.extract_strided_slice %15 {offsets = [0, 80], sizes = [8, 16], strides = [1, 1]} : vector<16x96xf32> to vector<8x16xf32>
    %69 = arith.truncf %68 : vector<8x16xf32> to vector<8x16xbf16>
    %70 = vector.extract_strided_slice %3 {offsets = [0, 224], sizes = [8, 32], strides = [1, 1]} : vector<16x256xf32> to vector<8x32xf32>
    %71 = arith.truncf %70 : vector<8x32xf32> to vector<8x32xbf16>
    %72 = vector.extract_strided_slice %12 {offsets = [0, 32], sizes = [8, 16], strides = [1, 1]} : vector<16x96xf32> to vector<8x16xf32>
    %73 = arith.truncf %72 : vector<8x16xf32> to vector<8x16xbf16>
    %74 = vector.extract_strided_slice %15 {offsets = [0, 32], sizes = [8, 16], strides = [1, 1]} : vector<16x96xf32> to vector<8x16xf32>
    %75 = arith.truncf %74 : vector<8x16xf32> to vector<8x16xbf16>
    %76 = tpu.transpose %67, [1, 0] : vector<8x16xbf16> -> vector<16x8xbf16>
    %cst_23 = arith.constant dense<0.000000e+00> : vector<8x8xf32>
    %77 = tpu.matmul %73, %76, %cst_23 {dimension_numbers = #tpu.dot_dimension_numbers<[1], [0], [0], [1], [0, 0, 1, 1], [], []>} : vector<8x16xbf16>, vector<16x8xbf16>, vector<8x8xf32> -> vector<8x8xf32>
    %78 = tpu.transpose %69, [1, 0] : vector<8x16xbf16> -> vector<16x8xbf16>
    %cst_24 = arith.constant dense<0.000000e+00> : vector<8x8xf32>
    %79 = tpu.matmul %75, %78, %cst_24 {dimension_numbers = #tpu.dot_dimension_numbers<[1], [0], [0], [1], [0, 0, 1, 1], [], []>} : vector<8x16xbf16>, vector<16x8xbf16>, vector<8x8xf32> -> vector<8x8xf32>
    %80 = arith.addf %77, %79 : vector<8x8xf32>
    %cst_25 = arith.constant dense<0xFF800000> : vector<8xf32>
    %81 = vector.multi_reduction <maximumf>, %80, %cst_25 [1] : vector<8x8xf32> to vector<8xf32>
    %82 = vector.shape_cast %81 : vector<8xf32> to vector<8x1xf32>
    %83 = vector.broadcast %82 : vector<8x1xf32> to vector<8x8xf32>
    %84 = arith.subf %80, %83 : vector<8x8xf32>
    %85 = math.exp %84 : vector<8x8xf32>
    %cst_26 = arith.constant dense<0.000000e+00> : vector<8xf32>
    %86 = vector.multi_reduction <add>, %85, %cst_26 [1] : vector<8x8xf32> to vector<8xf32>
    %87 = vector.shape_cast %86 : vector<8xf32> to vector<8x1xf32>
    %88 = tpu.reciprocal %87 {approx = true} : vector<8x1xf32> -> vector<8x1xf32>
    %89 = vector.broadcast %88 : vector<8x1xf32> to vector<8x8xf32>
    %90 = arith.mulf %85, %89 : vector<8x8xf32>
    %91 = arith.truncf %90 : vector<8x8xf32> to vector<8x8xbf16>
    %cst_27 = arith.constant dense<0.000000e+00> : vector<8x32xf32>
    %92 = tpu.matmul %91, %71, %cst_27 {dimension_numbers = #tpu.dot_dimension_numbers<[1], [0], [0], [1], [0, 0, 1, 1], [], []>} : vector<8x8xbf16>, vector<8x32xbf16>, vector<8x32xf32> -> vector<8x32xf32>
    %c0_28 = arith.constant 0 : index
    %c64 = arith.constant 64 : index
    %93 = vector.load %arg7[%c0_28, %c64] : memref<16x128xf32, #tpu.memory_space<vmem>>, vector<8x32xf32>
    tpu.vector_store %arg7[%c0_28, %c64], %92 {strides = array<i32>} : memref<16x128xf32, #tpu.memory_space<vmem>>, vector<8x32xf32>,
    %94 = vector.extract_strided_slice %12 {offsets = [0, 48], sizes = [8, 16], strides = [1, 1]} : vector<16x96xf32> to vector<8x16xf32>
    %95 = arith.truncf %94 : vector<8x16xf32> to vector<8x16xbf16>
    %96 = vector.extract_strided_slice %15 {offsets = [0, 48], sizes = [8, 16], strides = [1, 1]} : vector<16x96xf32> to vector<8x16xf32>
    %97 = arith.truncf %96 : vector<8x16xf32> to vector<8x16xbf16>
    %98 = tpu.transpose %67, [1, 0] : vector<8x16xbf16> -> vector<16x8xbf16>
    %cst_29 = arith.constant dense<0.000000e+00> : vector<8x8xf32>
    %99 = tpu.matmul %95, %98, %cst_29 {dimension_numbers = #tpu.dot_dimension_numbers<[1], [0], [0], [1], [0, 0, 1, 1], [], []>} : vector<8x16xbf16>, vector<16x8xbf16>, vector<8x8xf32> -> vector<8x8xf32>
    %100 = tpu.transpose %69, [1, 0] : vector<8x16xbf16> -> vector<16x8xbf16>
    %cst_30 = arith.constant dense<0.000000e+00> : vector<8x8xf32>
    %101 = tpu.matmul %97, %100, %cst_30 {dimension_numbers = #tpu.dot_dimension_numbers<[1], [0], [0], [1], [0, 0, 1, 1], [], []>} : vector<8x16xbf16>, vector<16x8xbf16>, vector<8x8xf32> -> vector<8x8xf32>
    %102 = arith.addf %99, %101 : vector<8x8xf32>
    %cst_31 = arith.constant dense<0xFF800000> : vector<8xf32>
    %103 = vector.multi_reduction <maximumf>, %102, %cst_31 [1] : vector<8x8xf32> to vector<8xf32>
    %104 = vector.shape_cast %103 : vector<8xf32> to vector<8x1xf32>
    %105 = vector.broadcast %104 : vector<8x1xf32> to vector<8x8xf32>
    %106 = arith.subf %102, %105 : vector<8x8xf32>
    %107 = math.exp %106 : vector<8x8xf32>
    %cst_32 = arith.constant dense<0.000000e+00> : vector<8xf32>
    %108 = vector.multi_reduction <add>, %107, %cst_32 [1] : vector<8x8xf32> to vector<8xf32>
    %109 = vector.shape_cast %108 : vector<8xf32> to vector<8x1xf32>
    %110 = tpu.reciprocal %109 {approx = true} : vector<8x1xf32> -> vector<8x1xf32>
    %111 = vector.broadcast %110 : vector<8x1xf32> to vector<8x8xf32>
    %112 = arith.mulf %107, %111 : vector<8x8xf32>
    %113 = arith.truncf %112 : vector<8x8xf32> to vector<8x8xbf16>
    %cst_33 = arith.constant dense<0.000000e+00> : vector<8x32xf32>
    %114 = tpu.matmul %113, %71, %cst_33 {dimension_numbers = #tpu.dot_dimension_numbers<[1], [0], [0], [1], [0, 0, 1, 1], [], []>} : vector<8x8xbf16>, vector<8x32xbf16>, vector<8x32xf32> -> vector<8x32xf32>
    %c0_34 = arith.constant 0 : index
    %c96_35 = arith.constant 96 : index
    %115 = vector.load %arg7[%c0_34, %c96_35] : memref<16x128xf32, #tpu.memory_space<vmem>>, vector<8x32xf32>
    tpu.vector_store %arg7[%c0_34, %c96_35], %114 {strides = array<i32>} : memref<16x128xf32, #tpu.memory_space<vmem>>, vector<8x32xf32>,
    %116 = vector.extract_strided_slice %12 {offsets = [8, 64], sizes = [8, 16], strides = [1, 1]} : vector<16x96xf32> to vector<8x16xf32>
    %117 = arith.truncf %116 : vector<8x16xf32> to vector<8x16xbf16>
    %118 = vector.extract_strided_slice %15 {offsets = [8, 64], sizes = [8, 16], strides = [1, 1]} : vector<16x96xf32> to vector<8x16xf32>
    %119 = arith.truncf %118 : vector<8x16xf32> to vector<8x16xbf16>
    %120 = vector.extract_strided_slice %3 {offsets = [8, 192], sizes = [8, 32], strides = [1, 1]} : vector<16x256xf32> to vector<8x32xf32>
    %121 = arith.truncf %120 : vector<8x32xf32> to vector<8x32xbf16>
    %122 = vector.extract_strided_slice %12 {offsets = [8, 0], sizes = [8, 16], strides = [1, 1]} : vector<16x96xf32> to vector<8x16xf32>
    %123 = arith.truncf %122 : vector<8x16xf32> to vector<8x16xbf16>
    %124 = vector.extract_strided_slice %15 {offsets = [8, 0], sizes = [8, 16], strides = [1, 1]} : vector<16x96xf32> to vector<8x16xf32>
    %125 = arith.truncf %124 : vector<8x16xf32> to vector<8x16xbf16>
    %126 = tpu.transpose %117, [1, 0] : vector<8x16xbf16> -> vector<16x8xbf16>
    %cst_36 = arith.constant dense<0.000000e+00> : vector<8x8xf32>
    %127 = tpu.matmul %123, %126, %cst_36 {dimension_numbers = #tpu.dot_dimension_numbers<[1], [0], [0], [1], [0, 0, 1, 1], [], []>} : vector<8x16xbf16>, vector<16x8xbf16>, vector<8x8xf32> -> vector<8x8xf32>
    %128 = tpu.transpose %119, [1, 0] : vector<8x16xbf16> -> vector<16x8xbf16>
    %cst_37 = arith.constant dense<0.000000e+00> : vector<8x8xf32>
    %129 = tpu.matmul %125, %128, %cst_37 {dimension_numbers = #tpu.dot_dimension_numbers<[1], [0], [0], [1], [0, 0, 1, 1], [], []>} : vector<8x16xbf16>, vector<16x8xbf16>, vector<8x8xf32> -> vector<8x8xf32>
    %130 = arith.addf %127, %129 : vector<8x8xf32>
    %cst_38 = arith.constant dense<0xFF800000> : vector<8xf32>
    %131 = vector.multi_reduction <maximumf>, %130, %cst_38 [1] : vector<8x8xf32> to vector<8xf32>
    %132 = vector.shape_cast %131 : vector<8xf32> to vector<8x1xf32>
    %133 = vector.broadcast %132 : vector<8x1xf32> to vector<8x8xf32>
    %134 = arith.subf %130, %133 : vector<8x8xf32>
    %135 = math.exp %134 : vector<8x8xf32>
    %cst_39 = arith.constant dense<0.000000e+00> : vector<8xf32>
    %136 = vector.multi_reduction <add>, %135, %cst_39 [1] : vector<8x8xf32> to vector<8xf32>
    %137 = vector.shape_cast %136 : vector<8xf32> to vector<8x1xf32>
    %138 = tpu.reciprocal %137 {approx = true} : vector<8x1xf32> -> vector<8x1xf32>
    %139 = vector.broadcast %138 : vector<8x1xf32> to vector<8x8xf32>
    %140 = arith.mulf %135, %139 : vector<8x8xf32>
    %141 = arith.truncf %140 : vector<8x8xf32> to vector<8x8xbf16>
    %cst_40 = arith.constant dense<0.000000e+00> : vector<8x32xf32>
    %142 = tpu.matmul %141, %121, %cst_40 {dimension_numbers = #tpu.dot_dimension_numbers<[1], [0], [0], [1], [0, 0, 1, 1], [], []>} : vector<8x8xbf16>, vector<8x32xbf16>, vector<8x32xf32> -> vector<8x32xf32>
    %c8 = arith.constant 8 : index
    %c0_41 = arith.constant 0 : index
    %143 = vector.load %arg7[%c8, %c0_41] : memref<16x128xf32, #tpu.memory_space<vmem>>, vector<8x32xf32>
    tpu.vector_store %arg7[%c8, %c0_41], %142 {strides = array<i32>} : memref<16x128xf32, #tpu.memory_space<vmem>>, vector<8x32xf32>,
    %144 = vector.extract_strided_slice %12 {offsets = [8, 16], sizes = [8, 16], strides = [1, 1]} : vector<16x96xf32> to vector<8x16xf32>
    %145 = arith.truncf %144 : vector<8x16xf32> to vector<8x16xbf16>
    %146 = vector.extract_strided_slice %15 {offsets = [8, 16], sizes = [8, 16], strides = [1, 1]} : vector<16x96xf32> to vector<8x16xf32>
    %147 = arith.truncf %146 : vector<8x16xf32> to vector<8x16xbf16>
    %148 = tpu.transpose %117, [1, 0] : vector<8x16xbf16> -> vector<16x8xbf16>
    %cst_42 = arith.constant dense<0.000000e+00> : vector<8x8xf32>
    %149 = tpu.matmul %145, %148, %cst_42 {dimension_numbers = #tpu.dot_dimension_numbers<[1], [0], [0], [1], [0, 0, 1, 1], [], []>} : vector<8x16xbf16>, vector<16x8xbf16>, vector<8x8xf32> -> vector<8x8xf32>
    %150 = tpu.transpose %119, [1, 0] : vector<8x16xbf16> -> vector<16x8xbf16>
    %cst_43 = arith.constant dense<0.000000e+00> : vector<8x8xf32>
    %151 = tpu.matmul %147, %150, %cst_43 {dimension_numbers = #tpu.dot_dimension_numbers<[1], [0], [0], [1], [0, 0, 1, 1], [], []>} : vector<8x16xbf16>, vector<16x8xbf16>, vector<8x8xf32> -> vector<8x8xf32>
    %152 = arith.addf %149, %151 : vector<8x8xf32>
    %cst_44 = arith.constant dense<0xFF800000> : vector<8xf32>
    %153 = vector.multi_reduction <maximumf>, %152, %cst_44 [1] : vector<8x8xf32> to vector<8xf32>
    %154 = vector.shape_cast %153 : vector<8xf32> to vector<8x1xf32>
    %155 = vector.broadcast %154 : vector<8x1xf32> to vector<8x8xf32>
    %156 = arith.subf %152, %155 : vector<8x8xf32>
    %157 = math.exp %156 : vector<8x8xf32>
    %cst_45 = arith.constant dense<0.000000e+00> : vector<8xf32>
    %158 = vector.multi_reduction <add>, %157, %cst_45 [1] : vector<8x8xf32> to vector<8xf32>
    %159 = vector.shape_cast %158 : vector<8xf32> to vector<8x1xf32>
    %160 = tpu.reciprocal %159 {approx = true} : vector<8x1xf32> -> vector<8x1xf32>
    %161 = vector.broadcast %160 : vector<8x1xf32> to vector<8x8xf32>
    %162 = arith.mulf %157, %161 : vector<8x8xf32>
    %163 = arith.truncf %162 : vector<8x8xf32> to vector<8x8xbf16>
    %cst_46 = arith.constant dense<0.000000e+00> : vector<8x32xf32>
    %164 = tpu.matmul %163, %121, %cst_46 {dimension_numbers = #tpu.dot_dimension_numbers<[1], [0], [0], [1], [0, 0, 1, 1], [], []>} : vector<8x8xbf16>, vector<8x32xbf16>, vector<8x32xf32> -> vector<8x32xf32>
    %c8_47 = arith.constant 8 : index
    %c32_48 = arith.constant 32 : index
    %165 = vector.load %arg7[%c8_47, %c32_48] : memref<16x128xf32, #tpu.memory_space<vmem>>, vector<8x32xf32>
    tpu.vector_store %arg7[%c8_47, %c32_48], %164 {strides = array<i32>} : memref<16x128xf32, #tpu.memory_space<vmem>>, vector<8x32xf32>,
    %166 = vector.extract_strided_slice %12 {offsets = [8, 80], sizes = [8, 16], strides = [1, 1]} : vector<16x96xf32> to vector<8x16xf32>
    %167 = arith.truncf %166 : vector<8x16xf32> to vector<8x16xbf16>
    %168 = vector.extract_strided_slice %15 {offsets = [8, 80], sizes = [8, 16], strides = [1, 1]} : vector<16x96xf32> to vector<8x16xf32>
    %169 = arith.truncf %168 : vector<8x16xf32> to vector<8x16xbf16>
    %170 = vector.extract_strided_slice %3 {offsets = [8, 224], sizes = [8, 32], strides = [1, 1]} : vector<16x256xf32> to vector<8x32xf32>
    %171 = arith.truncf %170 : vector<8x32xf32> to vector<8x32xbf16>
    %172 = vector.extract_strided_slice %12 {offsets = [8, 32], sizes = [8, 16], strides = [1, 1]} : vector<16x96xf32> to vector<8x16xf32>
    %173 = arith.truncf %172 : vector<8x16xf32> to vector<8x16xbf16>
    %174 = vector.extract_strided_slice %15 {offsets = [8, 32], sizes = [8, 16], strides = [1, 1]} : vector<16x96xf32> to vector<8x16xf32>
    %175 = arith.truncf %174 : vector<8x16xf32> to vector<8x16xbf16>
    %176 = tpu.transpose %167, [1, 0] : vector<8x16xbf16> -> vector<16x8xbf16>
    %cst_49 = arith.constant dense<0.000000e+00> : vector<8x8xf32>
    %177 = tpu.matmul %173, %176, %cst_49 {dimension_numbers = #tpu.dot_dimension_numbers<[1], [0], [0], [1], [0, 0, 1, 1], [], []>} : vector<8x16xbf16>, vector<16x8xbf16>, vector<8x8xf32> -> vector<8x8xf32>
    %178 = tpu.transpose %169, [1, 0] : vector<8x16xbf16> -> vector<16x8xbf16>
    %cst_50 = arith.constant dense<0.000000e+00> : vector<8x8xf32>
    %179 = tpu.matmul %175, %178, %cst_50 {dimension_numbers = #tpu.dot_dimension_numbers<[1], [0], [0], [1], [0, 0, 1, 1], [], []>} : vector<8x16xbf16>, vector<16x8xbf16>, vector<8x8xf32> -> vector<8x8xf32>
    %180 = arith.addf %177, %179 : vector<8x8xf32>
    %cst_51 = arith.constant dense<0xFF800000> : vector<8xf32>
    %181 = vector.multi_reduction <maximumf>, %180, %cst_51 [1] : vector<8x8xf32> to vector<8xf32>
    %182 = vector.shape_cast %181 : vector<8xf32> to vector<8x1xf32>
    %183 = vector.broadcast %182 : vector<8x1xf32> to vector<8x8xf32>
    %184 = arith.subf %180, %183 : vector<8x8xf32>
    %185 = math.exp %184 : vector<8x8xf32>
    %cst_52 = arith.constant dense<0.000000e+00> : vector<8xf32>
    %186 = vector.multi_reduction <add>, %185, %cst_52 [1] : vector<8x8xf32> to vector<8xf32>
    %187 = vector.shape_cast %186 : vector<8xf32> to vector<8x1xf32>
    %188 = tpu.reciprocal %187 {approx = true} : vector<8x1xf32> -> vector<8x1xf32>
    %189 = vector.broadcast %188 : vector<8x1xf32> to vector<8x8xf32>
    %190 = arith.mulf %185, %189 : vector<8x8xf32>
    %191 = arith.truncf %190 : vector<8x8xf32> to vector<8x8xbf16>
    %cst_53 = arith.constant dense<0.000000e+00> : vector<8x32xf32>
    %192 = tpu.matmul %191, %171, %cst_53 {dimension_numbers = #tpu.dot_dimension_numbers<[1], [0], [0], [1], [0, 0, 1, 1], [], []>} : vector<8x8xbf16>, vector<8x32xbf16>, vector<8x32xf32> -> vector<8x32xf32>
    %c8_54 = arith.constant 8 : index
    %c64_55 = arith.constant 64 : index
    %193 = vector.load %arg7[%c8_54, %c64_55] : memref<16x128xf32, #tpu.memory_space<vmem>>, vector<8x32xf32>
    tpu.vector_store %arg7[%c8_54, %c64_55], %192 {strides = array<i32>} : memref<16x128xf32, #tpu.memory_space<vmem>>, vector<8x32xf32>,
    %194 = vector.extract_strided_slice %12 {offsets = [8, 48], sizes = [8, 16], strides = [1, 1]} : vector<16x96xf32> to vector<8x16xf32>
    %195 = arith.truncf %194 : vector<8x16xf32> to vector<8x16xbf16>
    %196 = vector.extract_strided_slice %15 {offsets = [8, 48], sizes = [8, 16], strides = [1, 1]} : vector<16x96xf32> to vector<8x16xf32>
    %197 = arith.truncf %196 : vector<8x16xf32> to vector<8x16xbf16>
    %198 = tpu.transpose %167, [1, 0] : vector<8x16xbf16> -> vector<16x8xbf16>
    %cst_56 = arith.constant dense<0.000000e+00> : vector<8x8xf32>
    %199 = tpu.matmul %195, %198, %cst_56 {dimension_numbers = #tpu.dot_dimension_numbers<[1], [0], [0], [1], [0, 0, 1, 1], [], []>} : vector<8x16xbf16>, vector<16x8xbf16>, vector<8x8xf32> -> vector<8x8xf32>
    %200 = tpu.transpose %169, [1, 0] : vector<8x16xbf16> -> vector<16x8xbf16>
    %cst_57 = arith.constant dense<0.000000e+00> : vector<8x8xf32>
    %201 = tpu.matmul %197, %200, %cst_57 {dimension_numbers = #tpu.dot_dimension_numbers<[1], [0], [0], [1], [0, 0, 1, 1], [], []>} : vector<8x16xbf16>, vector<16x8xbf16>, vector<8x8xf32> -> vector<8x8xf32>
    %202 = arith.addf %199, %201 : vector<8x8xf32>
    %cst_58 = arith.constant dense<0xFF800000> : vector<8xf32>
    %203 = vector.multi_reduction <maximumf>, %202, %cst_58 [1] : vector<8x8xf32> to vector<8xf32>
    %204 = vector.shape_cast %203 : vector<8xf32> to vector<8x1xf32>
    %205 = vector.broadcast %204 : vector<8x1xf32> to vector<8x8xf32>
    %206 = arith.subf %202, %205 : vector<8x8xf32>
    %207 = math.exp %206 : vector<8x8xf32>
    %cst_59 = arith.constant dense<0.000000e+00> : vector<8xf32>
    %208 = vector.multi_reduction <add>, %207, %cst_59 [1] : vector<8x8xf32> to vector<8xf32>
    %209 = vector.shape_cast %208 : vector<8xf32> to vector<8x1xf32>
    %210 = tpu.reciprocal %209 {approx = true} : vector<8x1xf32> -> vector<8x1xf32>
    %211 = vector.broadcast %210 : vector<8x1xf32> to vector<8x8xf32>
    %212 = arith.mulf %207, %211 : vector<8x8xf32>
    %213 = arith.truncf %212 : vector<8x8xf32> to vector<8x8xbf16>
    %cst_60 = arith.constant dense<0.000000e+00> : vector<8x32xf32>
    %214 = tpu.matmul %213, %171, %cst_60 {dimension_numbers = #tpu.dot_dimension_numbers<[1], [0], [0], [1], [0, 0, 1, 1], [], []>} : vector<8x8xbf16>, vector<8x32xbf16>, vector<8x32xf32> -> vector<8x32xf32>
    %c8_61 = arith.constant 8 : index
    %c96_62 = arith.constant 96 : index
    %215 = vector.load %arg7[%c8_61, %c96_62] : memref<16x128xf32, #tpu.memory_space<vmem>>, vector<8x32xf32>
    tpu.vector_store %arg7[%c8_61, %c96_62], %214 {strides = array<i32>} : memref<16x128xf32, #tpu.memory_space<vmem>>, vector<8x32xf32>,
    %c0_63 = arith.constant 0 : index
    %c0_64 = arith.constant 0 : index
    %216 = vector.load %arg7[%c0_63, %c0_64] : memref<16x128xf32, #tpu.memory_space<vmem>>, vector<16x128xf32>
    %217 = arith.truncf %216 : vector<16x128xf32> to vector<16x128xbf16>
    %c0_65 = arith.constant 0 : index
    %c0_66 = arith.constant 0 : index
    %218 = vector.load %arg3[%c0_65, %c0_66] : memref<128x128xbf16, #tpu.memory_space<vmem>>, vector<128x128xbf16>
    %cst_67 = arith.constant dense<0.000000e+00> : vector<16x128xf32>
    %219 = tpu.matmul %217, %218, %cst_67 {dimension_numbers = #tpu.dot_dimension_numbers<[1], [0], [0], [1], [0, 0, 1, 1], [], []>} : vector<16x128xbf16>, vector<128x128xbf16>, vector<16x128xf32> -> vector<16x128xf32>
    %c0_68 = arith.constant 0 : index
    %c0_69 = arith.constant 0 : index
    %220 = vector.load %arg6[%c0_68, %c0_69] : memref<16x128xf32, #tpu.memory_space<vmem>>, vector<16x128xf32>
    tpu.vector_store %arg6[%c0_68, %c0_69], %219 {strides = array<i32>} : memref<16x128xf32, #tpu.memory_space<vmem>>, vector<16x128xf32>,
    return
  }
  func.func @transform_0(%arg0: i32) -> (i32, i32) {
    %c0_i32 = arith.constant 0 : i32
    %c0_i32_0 = arith.constant 0 : i32
    %c0_i32_1 = arith.constant 0 : i32
    return %c0_i32, %c0_i32_0 : i32, i32
  }
  func.func @transform_1(%arg0: i32) -> (i32, i32) {
    %c0_i32 = arith.constant 0 : i32
    %c0_i32_0 = arith.constant 0 : i32
    %c0_i32_1 = arith.constant 0 : i32
    return %c0_i32, %c0_i32_0 : i32, i32
  }
  func.func @transform_2(%arg0: i32) -> (i32, i32) {
    %c0_i32 = arith.constant 0 : i32
    %c0_i32_0 = arith.constant 0 : i32
    %c0_i32_1 = arith.constant 0 : i32
    return %c0_i32, %c0_i32_0 : i32, i32
  }
  func.func @transform_3(%arg0: i32) -> (i32, i32) {
    %c0_i32 = arith.constant 0 : i32
    %c0_i32_0 = arith.constant 0 : i32
    %c0_i32_1 = arith.constant 0 : i32
    return %c0_i32, %c0_i32_0 : i32, i32
  }
  func.func @transform_4(%arg0: i32) -> (i32, i32) {
    %c0_i32 = arith.constant 0 : i32
    %c0_i32_0 = arith.constant 0 : i32
    %c0_i32_1 = arith.constant 0 : i32
    return %c0_i32, %c0_i32_0 : i32, i32
  }
  func.func @transform_5(%arg0: i32) -> (i32, i32) {
    %c0_i32 = arith.constant 0 : i32
    %c0_i32_0 = arith.constant 0 : i32
    %c0_i32_1 = arith.constant 0 : i32
    return %c0_i32, %c0_i32_0 : i32, i32
  }
}

</mosaic_0001>

<llo_original>
// kernel: tpu_custom_call.1
$region0: #{tpu_custom_call.1}
  #allocation0 [shape = 'u32[]', space=smem, size = 0x4, offset = 0x4, fixed_abs, tag = 'smem constant byte address 0x4 - core index']
  #allocation1 [shape = 'u32[144,128]{1,0:T(1,128)}', space=vmem, size = 0x12000, scoped, tag = 'internal scratch']
  #allocation2 [shape = 'f32[16,128]{1,0:T(8,128)}', space=vmem, size = 0x2000, scoped, tag = 'scratch operand']
  %s0 = inlined_call_operand.hbm [shape: f32[16,128], index: 0, kind: input, shape index: {}]
  %s1 = inlined_call_operand.hbm [shape: bf16[128,256], index: 1, kind: input, shape index: {}]
  %s2 = inlined_call_operand.hbm [shape: bf16[128,128], index: 2, kind: input, shape index: {}]
  %s3 = inlined_call_operand.hbm [shape: f32[16,192], index: 3, kind: input, shape index: {}]
  %s4 = inlined_call_operand.hbm [shape: f32[16,192], index: 4, kind: input, shape index: {}]
  %s5 = inlined_call_operand.hbm [shape: f32[16,128], index: 5, kind: output, shape index: {}]
  %s6 = sld [smem:[#allocation0]]
  $region50: #{tpu_custom_call.1} parent=0
    _
  %s8 = ssub.s32 1, %s6
  %s9 = scalar_select 0, %s8, %s6
  $region1: #{tpu_custom_call.1} parent=0
    #allocation3 [shape = 'u8[8192]{0}', space=vmem, size = 0x2000, scoped, tag = 'input window, operand 0, single buffered']
    #allocation4 [shape = 's32[1]{0}', space=sflag, size = 0x4, scoped, tag = 'scoped memory for tpu_custom_call.1']
    #allocation5 [shape = 's32[1]{0}', space=sflag, size = 0x4, scoped, tag = 'scoped memory for tpu_custom_call.1']
    #allocation6 [shape = 'u8[65536]{0}', space=vmem, size = 0x10000, scoped, tag = 'input window, operand 1, single buffered']
    #allocation7 [shape = 's32[1]{0}', space=sflag, size = 0x4, scoped, tag = 'scoped memory for tpu_custom_call.1']
    #allocation8 [shape = 'u8[32768]{0}', space=vmem, size = 0x8000, scoped, tag = 'input window, operand 2, single buffered']
    #allocation9 [shape = 'u8[16384]{0}', space=vmem, size = 0x4000, scoped, tag = 'input window, operand 3, single buffered']
    #allocation10 [shape = 's32[1]{0}', space=sflag, size = 0x4, scoped, tag = 'scoped memory for tpu_custom_call.1']
    #allocation11 [shape = 'u8[16384]{0}', space=vmem, size = 0x4000, scoped, tag = 'input window, operand 4, single buffered']
    #allocation12 [shape = 'u8[8192]{0}', space=vmem, size = 0x2000, scoped, tag = 'output window, operand 0, single buffered']
    %10 = vsyncpa [#allocation4], 0
    %11 = vsyncpa [#allocation7], 0
    %12 = vsyncpa [#allocation10], 0
    %13 = vsyncpa [#allocation5], 0
    // Predicated region
    $region2: #{tpu_custom_call.1} parent=1 // pred_check
      _
    $region3: #{tpu_custom_call.1} parent=1 // pred_check_branch
      %15 = sbr.rel (0) target = $region5
    $region4: #{tpu_custom_call.1} parent=1 // pred_region
      %s17 = ssub.s32 256, 256
      %18 = vsyncadd [#allocation4], %s17
      %s19 = sshll.u32 [#allocation3], 4
      %s20 = int_to_ptr.vmem [resolvable:$true] %s19
      %25 = dma.hbm_to_vmem [thread:$0]  %s0, 256, %s20, [#allocation4], 128, 128, 8
    $region5: #{tpu_custom_call.1} parent=1 // pred_fallthru
      _
    // Predicated region
    $region6: #{tpu_custom_call.1} parent=1 // pred_check
      _
    $region7: #{tpu_custom_call.1} parent=1 // pred_check_branch
      %27 = sbr.rel (0) target = $region9
    $region8: #{tpu_custom_call.1} parent=1 // pred_region
      %s29 = ssub.s32 2048, 2048
      %30 = vsyncadd [#allocation7], %s29
      %s31 = sshll.u32 [#allocation6], 4
      %s32 = int_to_ptr.vmem [resolvable:$true] %s31
      %37 = dma.hbm_to_vmem [thread:$0]  %s1, 2048, %s32, [#allocation7], 128, 128, 8
    $region9: #{tpu_custom_call.1} parent=1 // pred_fallthru
      _
    // Predicated region
    $region10: #{tpu_custom_call.1} parent=1 // pred_check
      _
    $region11: #{tpu_custom_call.1} parent=1 // pred_check_branch
      %39 = sbr.rel (0) target = $region13
    $region12: #{tpu_custom_call.1} parent=1 // pred_region
      %s41 = ssub.s32 1024, 1024
      %42 = vsyncadd [#allocation7], %s41
      %s43 = sshll.u32 [#allocation8], 4
      %s44 = int_to_ptr.vmem [resolvable:$true] %s43
      %49 = dma.hbm_to_vmem [thread:$0]  %s2, 1024, %s44, [#allocation7], 64, 64, 4
    $region13: #{tpu_custom_call.1} parent=1 // pred_fallthru
      _
    // Predicated region
    $region14: #{tpu_custom_call.1} parent=1 // pred_check
      _
    $region15: #{tpu_custom_call.1} parent=1 // pred_check_branch
      %51 = sbr.rel (0) target = $region17
    $region16: #{tpu_custom_call.1} parent=1 // pred_region
      %s53 = ssub.s32 512, 512
      %54 = vsyncadd [#allocation10], %s53
      %s55 = sshll.u32 [#allocation9], 4
      %s56 = int_to_ptr.vmem [resolvable:$true] %s55
      %61 = dma.hbm_to_vmem [thread:$0]  %s3, 512, %s56, [#allocation10], 256, 256, 16
    $region17: #{tpu_custom_call.1} parent=1 // pred_fallthru
      _
    // Predicated region
    $region18: #{tpu_custom_call.1} parent=1 // pred_check
      _
    $region19: #{tpu_custom_call.1} parent=1 // pred_check_branch
      %63 = sbr.rel (0) target = $region21
    $region20: #{tpu_custom_call.1} parent=1 // pred_region
      %s65 = ssub.s32 512, 512
      %66 = vsyncadd [#allocation10], %s65
      %s67 = sshll.u32 [#allocation11], 4
      %s68 = int_to_ptr.vmem [resolvable:$true] %s67
      %73 = dma.hbm_to_vmem [thread:$0]  %s4, 512, %s68, [#allocation10], 256, 256, 16
    $region21: #{tpu_custom_call.1} parent=1 // pred_fallthru
      _
    // Predicated region
    $region22: #{tpu_custom_call.1} parent=1 // pred_check
      _
    $region23: #{tpu_custom_call.1} parent=1 // pred_check_branch
      %75 = sbr.rel (0) target = $region25
    $region24: #{tpu_custom_call.1} parent=1 // pred_region
      %76 = dma.done [#allocation4], 256
    $region25: #{tpu_custom_call.1} parent=1 // pred_fallthru
      _
    // Predicated region
    $region26: #{tpu_custom_call.1} parent=1 // pred_check
      _
    $region27: #{tpu_custom_call.1} parent=1 // pred_check_branch
      %78 = sbr.rel (0) target = $region29
    $region28: #{tpu_custom_call.1} parent=1 // pred_region
      %79 = dma.done [#allocation7], 2048
    $region29: #{tpu_custom_call.1} parent=1 // pred_fallthru
      _
    // Predicated region
    $region30: #{tpu_custom_call.1} parent=1 // pred_check
      _
    $region31: #{tpu_custom_call.1} parent=1 // pred_check_branch
      %81 = sbr.rel (0) target = $region33
    $region32: #{tpu_custom_call.1} parent=1 // pred_region
      %82 = dma.done [#allocation7], 1024
    $region33: #{tpu_custom_call.1} parent=1 // pred_fallthru
      _
    // Predicated region
    $region34: #{tpu_custom_call.1} parent=1 // pred_check
      _
    $region35: #{tpu_custom_call.1} parent=1 // pred_check_branch
      %84 = sbr.rel (0) target = $region37
    $region36: #{tpu_custom_call.1} parent=1 // pred_region
      %85 = dma.done [#allocation10], 512
    $region37: #{tpu_custom_call.1} parent=1 // pred_fallthru
      _
    // Predicated region
    $region38: #{tpu_custom_call.1} parent=1 // pred_check
      _
    $region39: #{tpu_custom_call.1} parent=1 // pred_check_branch
      %87 = sbr.rel (0) target = $region41
    $region40: #{tpu_custom_call.1} parent=1 // pred_region
      %88 = dma.done [#allocation10], 512
    $region41: #{tpu_custom_call.1} parent=1 // pred_fallthru
      _
    %v90 = vld [vmem:[#allocation3] sm:$0xff]
    %v91 = vld [vmem:[#allocation3 + $0x8] sm:$0xff]
    %v92 = vpack.c.bf16 %v91, %v90
    %v93 = vld [vmem:[#allocation6] sm:$0xff]
    %v94 = vld [vmem:[#allocation6 + $0x8] sm:$0xff]
    %v95 = vld [vmem:[#allocation6 + $0x10] sm:$0xff]
    %v96 = vld [vmem:[#allocation6 + $0x18] sm:$0xff]
    %v97 = vld [vmem:[#allocation6 + $0x20] sm:$0xff]
    %v98 = vld [vmem:[#allocation6 + $0x28] sm:$0xff]
    %v99 = vld [vmem:[#allocation6 + $0x30] sm:$0xff]
    %v100 = vld [vmem:[#allocation6 + $0x38] sm:$0xff]
    %v101 = vld [vmem:[#allocation6 + $0x40] sm:$0xff]
    %v102 = vld [vmem:[#allocation6 + $0x48] sm:$0xff]
    %v103 = vld [vmem:[#allocation6 + $0x50] sm:$0xff]
    %v104 = vld [vmem:[#allocation6 + $0x58] sm:$0xff]
    %v105 = vld [vmem:[#allocation6 + $0x60] sm:$0xff]
    %v106 = vld [vmem:[#allocation6 + $0x68] sm:$0xff]
    %v107 = vld [vmem:[#allocation6 + $0x70] sm:$0xff]
    %v108 = vld [vmem:[#allocation6 + $0x78] sm:$0xff]
    %v125 = vunpack.c.l.b16 %v93
    %v126 = vunpack.c.h.b16 %v93
    %v127 = vunpack.c.l.b16 %v94
    %v128 = vunpack.c.h.b16 %v94
    %v129 = vunpack.c.l.b16 %v95
    %v130 = vunpack.c.h.b16 %v95
    %v131 = vunpack.c.l.b16 %v96
    %v132 = vunpack.c.h.b16 %v96
    %v133 = vunpack.c.l.b16 %v97
    %v134 = vunpack.c.h.b16 %v97
    %v135 = vunpack.c.l.b16 %v98
    %v136 = vunpack.c.h.b16 %v98
    %v137 = vunpack.c.l.b16 %v99
    %v138 = vunpack.c.h.b16 %v99
    %v139 = vunpack.c.l.b16 %v100
    %v140 = vunpack.c.h.b16 %v100
    %v141 = vunpack.c.l.b16 %v101
    %v142 = vunpack.c.h.b16 %v101
    %v143 = vunpack.c.l.b16 %v102
    %v144 = vunpack.c.h.b16 %v102
    %v145 = vunpack.c.l.b16 %v103
    %v146 = vunpack.c.h.b16 %v103
    %v147 = vunpack.c.l.b16 %v104
    %v148 = vunpack.c.h.b16 %v104
    %v149 = vunpack.c.l.b16 %v105
    %v150 = vunpack.c.h.b16 %v105
    %v151 = vunpack.c.l.b16 %v106
    %v152 = vunpack.c.h.b16 %v106
    %v153 = vunpack.c.l.b16 %v107
    %v154 = vunpack.c.h.b16 %v107
    %v155 = vunpack.c.l.b16 %v108
    %v156 = vunpack.c.h.b16 %v108
    %v157 = vpack.c.b16 %v127, %v125
    %v158 = vpack.c.b16 %v128, %v126
    %v159 = vpack.c.b16 %v131, %v129
    %v160 = vpack.c.b16 %v132, %v130
    %v161 = vpack.c.b16 %v135, %v133
    %v162 = vpack.c.b16 %v136, %v134
    %v163 = vpack.c.b16 %v139, %v137
    %v164 = vpack.c.b16 %v140, %v138
    %v165 = vpack.c.b16 %v143, %v141
    %v166 = vpack.c.b16 %v144, %v142
    %v167 = vpack.c.b16 %v147, %v145
    %v168 = vpack.c.b16 %v148, %v146
    %v169 = vpack.c.b16 %v151, %v149
    %v170 = vpack.c.b16 %v152, %v150
    %v171 = vpack.c.b16 %v155, %v153
    %v172 = vpack.c.b16 %v156, %v154
    %189 = vmatprep.subr.bf16.mxu0 %v158
    %190 = vmatpush1.bf16.msra.mxu0 %v157
    %191 = vmatprep.subr.bf16.mxu0 %v160
    %192 = vmatpush1.bf16.msra.mxu0 %v159
    %193 = vmatprep.subr.bf16.mxu0 %v162
    %194 = vmatpush1.bf16.msra.mxu0 %v161
    %195 = vmatprep.subr.bf16.mxu0 %v164
    %196 = vmatpush1.bf16.msra.mxu0 %v163
    %197 = vmatprep.subr.bf16.mxu0 %v166
    %198 = vmatpush1.bf16.msra.mxu0 %v165
    %199 = vmatprep.subr.bf16.mxu0 %v168
    %200 = vmatpush1.bf16.msra.mxu0 %v167
    %201 = vmatprep.subr.bf16.mxu0 %v170
    %202 = vmatpush1.bf16.msra.mxu0 %v169
    %203 = vmatprep.subr.bf16.mxu0 %v172
    %204 = vmatpush1.bf16.msra.mxu0 %v171
    %205 = vmatprep.subr.bf16.mxu0 0
    %206 = vmatpush1.bf16.msra.mxu0 0
    %207 = vmatprep.subr.bf16.mxu0 0
    %208 = vmatpush1.bf16.msra.mxu0 0
    %209 = vmatprep.subr.bf16.mxu0 0
    %210 = vmatpush1.bf16.msra.mxu0 0
    %211 = vmatprep.subr.bf16.mxu0 0
    %212 = vmatpush1.bf16.msra.mxu0 0
    %213 = vmatprep.subr.bf16.mxu0 0
    %214 = vmatpush1.bf16.msra.mxu0 0
    %215 = vmatprep.subr.bf16.mxu0 0
    %216 = vmatpush1.bf16.msra.mxu0 0
    %217 = vmatprep.subr.bf16.mxu0 0
    %218 = vmatpush1.bf16.msra.mxu0 0
    %219 = vmatprep.subr.bf16.mxu0 0
    %220 = vmatpush1.bf16.msra.mxu0 0
    %221 = vmatprep.mubr.bf16.mxu0 0
    %222 = vmatmul.mubr.bf16.gmra.mrb[0].mxu0 %v92
    %v223 = vpop.f32.mrb[0].mxu0
    %v224 = vadd.f32 0.0, %v223
    %v225 = vpop.f32.mrb[0].mxu0
    %v226 = vadd.f32 0.0, %v225
    %v227 = vpop.f32.mrb[0].mxu0
    %v228 = vadd.f32 0.0, %v227
    %v229 = vpop.f32.mrb[0].mxu0
    %v230 = vadd.f32 0.0, %v229
    %231 = vdwg.mxu0
    %v232 = vld [vmem:[#allocation9] sm:$0xff]
    %v233 = vld [vmem:[#allocation9 + $0x10] sm:$0xff]
    %v234 = vld [vmem:[#allocation9 + $0x8] sm:$0xff]
    %v235 = vld [vmem:[#allocation9 + $0x18] sm:$0xff]
    %v236 = vld [vmem:[#allocation11] sm:$0xff]
    %v237 = vld [vmem:[#allocation11 + $0x10] sm:$0xff]
    %v238 = vld [vmem:[#allocation11 + $0x8] sm:$0xff]
    %v239 = vld [vmem:[#allocation11 + $0x18] sm:$0xff]
    %v240 = vmul.f32 %v224, %v232
    %v241 = vmul.f32 %v228, %v233
    %244 = vrot.lane.b32.xlu0 %v236, 96
    %v245 = vpop.permute.xlu0 %244
    %246 = vrot.lane.b32.xlu0 %v237, 96
    %v247 = vpop.permute.xlu0 %246
    %v250 = vmul.f32 %v224, %v245
    %v251 = vmul.f32 %v226, %v245
    %v252 = vmul.f32 %v228, %v247
    %v253 = vmul.f32 %v230, %v247
    %258 = vrot.lane.b32.xlu0 %v250, 32
    %v259 = vpop.permute.xlu0 %258
    %260 = vrot.lane.b32.xlu0 %v251, 32
    %v261 = vpop.permute.xlu0 %260
    %262 = vrot.lane.b32.xlu0 %v252, 32
    %v263 = vpop.permute.xlu0 %262
    %264 = vrot.lane.b32.xlu0 %v253, 32
    %v265 = vpop.permute.xlu0 %264
    %vm266 = vcmask 261120
    %v267 = vsel %vm266, %v259, %v261
    %v268 = vsel %vm266, %v263, %v265
    %v271 = vsub.f32 %v240, %v267
    %v272 = vsub.f32 %v241, %v268
    %v273 = vmul.f32 %v226, %v234
    %v274 = vmul.f32 %v230, %v235
    %277 = vrot.lane.b32.xlu0 %v236, 32
    %v278 = vpop.permute.xlu0 %277
    %279 = vrot.lane.b32.xlu0 %v238, 32
    %v280 = vpop.permute.xlu0 %279
    %281 = vrot.lane.b32.xlu0 %v237, 32
    %v282 = vpop.permute.xlu0 %281
    %283 = vrot.lane.b32.xlu0 %v239, 32
    %v284 = vpop.permute.xlu0 %283
    %v285 = vsel %vm266, %v278, %v280
    %v286 = vsel %vm266, %v282, %v284
    %v289 = vmul.f32 %v224, %v285
    %v290 = vmul.f32 %v228, %v286
    %293 = vrot.lane.b32.xlu0 %v289, 96
    %v294 = vpop.permute.xlu0 %293
    %295 = vrot.lane.b32.xlu0 %v290, 96
    %v296 = vpop.permute.xlu0 %295
    %v299 = vadd.f32 %v240, %v294
    %v300 = vadd.f32 %v273, %v294
    %v301 = vadd.f32 %v241, %v296
    %v302 = vadd.f32 %v274, %v296
    %v303 = vpack.c.bf16 %v271, %v271
    %v304 = vpack.c.bf16 %v300, %v300
    %v305 = vpack.c.bf16 %v226, %v226
    %v306 = vpack.c.bf16 %v299, %v299
    %308 = vrot.lane.b32.xlu0 %v306, 32
    %v309 = vpop.permute.xlu0 %308
    %311 = vrot.lane.b32.xlu0 %v304, 96
    %v312 = vpop.permute.xlu0 %311
    %vm313 = vcmask 130048
    %v315 = vsel %vm313, %v309, 0
    %v318 = vsel %vm313, %v312, 0
    %320 = vmatprep.subr.bf16.mxu0 0
    %321 = vmatpush1.bf16.xpose.msra.mxu0 %v318
    %322 = vmatprep.subr.bf16.mxu0 0
    %323 = vmatpush1.bf16.xpose.msra.mxu0 0
    %324 = vmatprep.subr.bf16.mxu0 0
    %325 = vmatpush1.bf16.xpose.msra.mxu0 0
    %326 = vmatprep.subr.bf16.mxu0 0
    %327 = vmatpush1.bf16.xpose.msra.mxu0 0
    %328 = vmatprep.subr.bf16.mxu0 0
    %329 = vmatpush1.bf16.xpose.msra.mxu0 0
    %330 = vmatprep.subr.bf16.mxu0 0
    %331 = vmatpush1.bf16.xpose.msra.mxu0 0
    %332 = vmatprep.subr.bf16.mxu0 0
    %333 = vmatpush1.bf16.xpose.msra.mxu0 0
    %334 = vmatprep.subr.bf16.mxu0 0
    %335 = vmatpush1.bf16.xpose.msra.mxu0 0
    %336 = vmatprep.subr.bf16.mxu0 0
    %337 = vmatpush1.bf16.xpose.msra.mxu0 0
    %338 = vmatprep.subr.bf16.mxu0 0
    %339 = vmatpush1.bf16.xpose.msra.mxu0 0
    %340 = vmatprep.subr.bf16.mxu0 0
    %341 = vmatpush1.bf16.xpose.msra.mxu0 0
    %342 = vmatprep.subr.bf16.mxu0 0
    %343 = vmatpush1.bf16.xpose.msra.mxu0 0
    %344 = vmatprep.subr.bf16.mxu0 0
    %345 = vmatpush1.bf16.xpose.msra.mxu0 0
    %346 = vmatprep.subr.bf16.mxu0 0
    %347 = vmatpush1.bf16.xpose.msra.mxu0 0
    %348 = vmatprep.subr.bf16.mxu0 0
    %349 = vmatpush1.bf16.xpose.msra.mxu0 0
    %350 = vmatprep.subr.bf16.mxu0 0
    %351 = vmatpush1.bf16.xpose.msra.mxu0 0
    %352 = vmatprep.mubr.bf16.mxu0 0
    %353 = vmatmul.mubr.bf16.gmra.mrb[0].mxu0 %v315
    %v354 = vpop.f32.mrb[0].mxu0
    %v355 = vadd.f32 0.0, %v354
    %v356 = vpop.f32.mrb[0].mxu0
    %v357 = vpop.f32.mrb[0].mxu0
    %v358 = vpop.f32.mrb[0].mxu0
    %359 = vdwg.mxu0
    %361 = vrot.lane.b32.xlu0 %v303, 64
    %v362 = vpop.permute.xlu0 %361
    %v364 = vsel %vm313, %v303, 0
    %v367 = vsel %vm313, %v362, 0
    %369 = vmatprep.subr.bf16.mxu0 0
    %370 = vmatpush1.bf16.xpose.msra.mxu0 %v367
    %371 = vmatprep.subr.bf16.mxu0 0
    %372 = vmatpush1.bf16.xpose.msra.mxu0 0
    %373 = vmatprep.subr.bf16.mxu0 0
    %374 = vmatpush1.bf16.xpose.msra.mxu0 0
    %375 = vmatprep.subr.bf16.mxu0 0
    %376 = vmatpush1.bf16.xpose.msra.mxu0 0
    %377 = vmatprep.subr.bf16.mxu0 0
    %378 = vmatpush1.bf16.xpose.msra.mxu0 0
    %379 = vmatprep.subr.bf16.mxu0 0
    %380 = vmatpush1.bf16.xpose.msra.mxu0 0
    %381 = vmatprep.subr.bf16.mxu0 0
    %382 = vmatpush1.bf16.xpose.msra.mxu0 0
    %383 = vmatprep.subr.bf16.mxu0 0
    %384 = vmatpush1.bf16.xpose.msra.mxu0 0
    %385 = vmatprep.subr.bf16.mxu0 0
    %386 = vmatpush1.bf16.xpose.msra.mxu0 0
    %387 = vmatprep.subr.bf16.mxu0 0
    %388 = vmatpush1.bf16.xpose.msra.mxu0 0
    %389 = vmatprep.subr.bf16.mxu0 0
    %390 = vmatpush1.bf16.xpose.msra.mxu0 0
    %391 = vmatprep.subr.bf16.mxu0 0
    %392 = vmatpush1.bf16.xpose.msra.mxu0 0
    %393 = vmatprep.subr.bf16.mxu0 0
    %394 = vmatpush1.bf16.xpose.msra.mxu0 0
    %395 = vmatprep.subr.bf16.mxu0 0
    %396 = vmatpush1.bf16.xpose.msra.mxu0 0
    %397 = vmatprep.subr.bf16.mxu0 0
    %398 = vmatpush1.bf16.xpose.msra.mxu0 0
    %399 = vmatprep.subr.bf16.mxu0 0
    %400 = vmatpush1.bf16.xpose.msra.mxu0 0
    %401 = vmatprep.mubr.bf16.mxu0 0
    %402 = vmatmul.mubr.bf16.gmra.mrb[0].mxu0 %v364
    %v403 = vpop.f32.mrb[0].mxu0
    %v404 = vadd.f32 %v355, %v403
    %v405 = vpop.f32.mrb[0].mxu0
    %v406 = vpop.f32.mrb[0].mxu0
    %v407 = vpop.f32.mrb[0].mxu0
    %408 = vdwg.mxu0
    %vm409 = vcmask 64512
    %v410 = vsel %vm409, %v404, -inf
    %411 = vmax.xlane.f32.xlu0 %v410
    %v412 = vpop.xlane.xlu0 %411
    %v413 = vsub.f32 %v404, %v412
    %v414 = vmul.f32 %v413, 1.442695
    %v415 = vpow.pop %v414
    %v416 = vsel %vm409, %v415, 0.0
    %417 = vadd.xlane.f32.xlu0 %v416
    %v418 = vpop.xlane.xlu0 %417
    %v419 = vrcp.pop %v418
    %v420 = vmul.f32 %v415, %v419
    %v421 = vpack.c.bf16 %v420, %v420
    %423 = vrot.lane.b32.xlu0 %v305, 64
    %v424 = vpop.permute.xlu0 %423
    %v426 = vsel %vm409, %v421, 0
    %vm428 = vcmask 1043456
    %v430 = vsel %vm428, %v424, 0
    %432 = vmatprep.subr.bf16.mxu0 0
    %433 = vmatpush1.bf16.msra.mxu0 %v430
    %434 = vmatprep.subr.bf16.mxu0 0
    %435 = vmatpush1.bf16.msra.mxu0 0
    %436 = vmatprep.subr.bf16.mxu0 0
    %437 = vmatpush1.bf16.msra.mxu0 0
    %438 = vmatprep.subr.bf16.mxu0 0
    %439 = vmatpush1.bf16.msra.mxu0 0
    %440 = vmatprep.subr.bf16.mxu0 0
    %441 = vmatpush1.bf16.msra.mxu0 0
    %442 = vmatprep.subr.bf16.mxu0 0
    %443 = vmatpush1.bf16.msra.mxu0 0
    %444 = vmatprep.subr.bf16.mxu0 0
    %445 = vmatpush1.bf16.msra.mxu0 0
    %446 = vmatprep.subr.bf16.mxu0 0
    %447 = vmatpush1.bf16.msra.mxu0 0
    %448 = vmatprep.subr.bf16.mxu0 0
    %449 = vmatpush1.bf16.msra.mxu0 0
    %450 = vmatprep.subr.bf16.mxu0 0
    %451 = vmatpush1.bf16.msra.mxu0 0
    %452 = vmatprep.subr.bf16.mxu0 0
    %453 = vmatpush1.bf16.msra.mxu0 0
    %454 = vmatprep.subr.bf16.mxu0 0
    %455 = vmatpush1.bf16.msra.mxu0 0
    %456 = vmatprep.subr.bf16.mxu0 0
    %457 = vmatpush1.bf16.msra.mxu0 0
    %458 = vmatprep.subr.bf16.mxu0 0
    %459 = vmatpush1.bf16.msra.mxu0 0
    %460 = vmatprep.subr.bf16.mxu0 0
    %461 = vmatpush1.bf16.msra.mxu0 0
    %462 = vmatprep.subr.bf16.mxu0 0
    %463 = vmatpush1.bf16.msra.mxu0 0
    %464 = vmatprep.mubr.bf16.mxu0 0
    %465 = vmatmul.mubr.bf16.gmra.mrb[0].mxu0 %v426
    %v466 = vpop.f32.mrb[0].mxu0
    %v467 = vadd.f32 0.0, %v466
    %v468 = vpop.f32.mrb[0].mxu0
    %v469 = vpop.f32.mrb[0].mxu0
    %v470 = vpop.f32.mrb[0].mxu0
    %471 = vdwg.mxu0
    %472 = vst.msk [vmem:[#allocation2] sm:$0xff] %vm266, %v467
    %473 = vrot.lane.b32.xlu0 %v306, 16
    %v474 = vpop.permute.xlu0 %473
    %v476 = vsel %vm313, %v474, 0
    %478 = vmatprep.subr.bf16.mxu0 0
    %479 = vmatpush1.bf16.xpose.msra.mxu0 %v318
    %480 = vmatprep.subr.bf16.mxu0 0
    %481 = vmatpush1.bf16.xpose.msra.mxu0 0
    %482 = vmatprep.subr.bf16.mxu0 0
    %483 = vmatpush1.bf16.xpose.msra.mxu0 0
    %484 = vmatprep.subr.bf16.mxu0 0
    %485 = vmatpush1.bf16.xpose.msra.mxu0 0
    %486 = vmatprep.subr.bf16.mxu0 0
    %487 = vmatpush1.bf16.xpose.msra.mxu0 0
    %488 = vmatprep.subr.bf16.mxu0 0
    %489 = vmatpush1.bf16.xpose.msra.mxu0 0
    %490 = vmatprep.subr.bf16.mxu0 0
    %491 = vmatpush1.bf16.xpose.msra.mxu0 0
    %492 = vmatprep.subr.bf16.mxu0 0
    %493 = vmatpush1.bf16.xpose.msra.mxu0 0
    %494 = vmatprep.subr.bf16.mxu0 0
    %495 = vmatpush1.bf16.xpose.msra.mxu0 0
    %496 = vmatprep.subr.bf16.mxu0 0
    %497 = vmatpush1.bf16.xpose.msra.mxu0 0
    %498 = vmatprep.subr.bf16.mxu0 0
    %499 = vmatpush1.bf16.xpose.msra.mxu0 0
    %500 = vmatprep.subr.bf16.mxu0 0
    %501 = vmatpush1.bf16.xpose.msra.mxu0 0
    %502 = vmatprep.subr.bf16.mxu0 0
    %503 = vmatpush1.bf16.xpose.msra.mxu0 0
    %504 = vmatprep.subr.bf16.mxu0 0
    %505 = vmatpush1.bf16.xpose.msra.mxu0 0
    %506 = vmatprep.subr.bf16.mxu0 0
    %507 = vmatpush1.bf16.xpose.msra.mxu0 0
    %508 = vmatprep.subr.bf16.mxu0 0
    %509 = vmatpush1.bf16.xpose.msra.mxu0 0
    %510 = vmatprep.mubr.bf16.mxu0 0
    %511 = vmatmul.mubr.bf16.gmra.mrb[0].mxu0 %v476
    %v512 = vpop.f32.mrb[0].mxu0
    %v513 = vadd.f32 0.0, %v512
    %v514 = vpop.f32.mrb[0].mxu0
    %v515 = vpop.f32.mrb[0].mxu0
    %v516 = vpop.f32.mrb[0].mxu0
    %517 = vdwg.mxu0
    %518 = vrot.lane.b32.xlu0 %v303, 112
    %v519 = vpop.permute.xlu0 %518
    %v521 = vsel %vm313, %v519, 0
    %523 = vmatprep.subr.bf16.mxu0 0
    %524 = vmatpush1.bf16.xpose.msra.mxu0 %v367
    %525 = vmatprep.subr.bf16.mxu0 0
    %526 = vmatpush1.bf16.xpose.msra.mxu0 0
    %527 = vmatprep.subr.bf16.mxu0 0
    %528 = vmatpush1.bf16.xpose.msra.mxu0 0
    %529 = vmatprep.subr.bf16.mxu0 0
    %530 = vmatpush1.bf16.xpose.msra.mxu0 0
    %531 = vmatprep.subr.bf16.mxu0 0
    %532 = vmatpush1.bf16.xpose.msra.mxu0 0
    %533 = vmatprep.subr.bf16.mxu0 0
    %534 = vmatpush1.bf16.xpose.msra.mxu0 0
    %535 = vmatprep.subr.bf16.mxu0 0
    %536 = vmatpush1.bf16.xpose.msra.mxu0 0
    %537 = vmatprep.subr.bf16.mxu0 0
    %538 = vmatpush1.bf16.xpose.msra.mxu0 0
    %539 = vmatprep.subr.bf16.mxu0 0
    %540 = vmatpush1.bf16.xpose.msra.mxu0 0
    %541 = vmatprep.subr.bf16.mxu0 0
    %542 = vmatpush1.bf16.xpose.msra.mxu0 0
    %543 = vmatprep.subr.bf16.mxu0 0
    %544 = vmatpush1.bf16.xpose.msra.mxu0 0
    %545 = vmatprep.subr.bf16.mxu0 0
    %546 = vmatpush1.bf16.xpose.msra.mxu0 0
    %547 = vmatprep.subr.bf16.mxu0 0
    %548 = vmatpush1.bf16.xpose.msra.mxu0 0
    %549 = vmatprep.subr.bf16.mxu0 0
    %550 = vmatpush1.bf16.xpose.msra.mxu0 0
    %551 = vmatprep.subr.bf16.mxu0 0
    %552 = vmatpush1.bf16.xpose.msra.mxu0 0
    %553 = vmatprep.subr.bf16.mxu0 0
    %554 = vmatpush1.bf16.xpose.msra.mxu0 0
    %555 = vmatprep.mubr.bf16.mxu0 0
    %556 = vmatmul.mubr.bf16.gmra.mrb[0].mxu0 %v521
    %v557 = vpop.f32.mrb[0].mxu0
    %v558 = vadd.f32 %v513, %v557
    %v559 = vpop.f32.mrb[0].mxu0
    %v560 = vpop.f32.mrb[0].mxu0
    %v561 = vpop.f32.mrb[0].mxu0
    %562 = vdwg.mxu0
    %v563 = vsel %vm409, %v558, -inf
    %564 = vmax.xlane.f32.xlu0 %v563
    %v565 = vpop.xlane.xlu0 %564
    %v566 = vsub.f32 %v558, %v565
    %v567 = vmul.f32 %v566, 1.442695
    %v568 = vpow.pop %v567
    %v569 = vsel %vm409, %v568, 0.0
    %570 = vadd.xlane.f32.xlu0 %v569
    %v571 = vpop.xlane.xlu0 %570
    %v572 = vrcp.pop %v571
    %v573 = vmul.f32 %v568, %v572
    %v574 = vpack.c.bf16 %v573, %v573
    %v576 = vsel %vm409, %v574, 0
    %578 = vmatprep.subr.bf16.mxu0 0
    %579 = vmatpush1.bf16.msra.mxu0 %v430
    %580 = vmatprep.subr.bf16.mxu0 0
    %581 = vmatpush1.bf16.msra.mxu0 0
    %582 = vmatprep.subr.bf16.mxu0 0
    %583 = vmatpush1.bf16.msra.mxu0 0
    %584 = vmatprep.subr.bf16.mxu0 0
    %585 = vmatpush1.bf16.msra.mxu0 0
    %586 = vmatprep.subr.bf16.mxu0 0
    %587 = vmatpush1.bf16.msra.mxu0 0
    %588 = vmatprep.subr.bf16.mxu0 0
    %589 = vmatpush1.bf16.msra.mxu0 0
    %590 = vmatprep.subr.bf16.mxu0 0
    %591 = vmatpush1.bf16.msra.mxu0 0
    %592 = vmatprep.subr.bf16.mxu0 0
    %593 = vmatpush1.bf16.msra.mxu0 0
    %594 = vmatprep.subr.bf16.mxu0 0
    %595 = vmatpush1.bf16.msra.mxu0 0
    %596 = vmatprep.subr.bf16.mxu0 0
    %597 = vmatpush1.bf16.msra.mxu0 0
    %598 = vmatprep.subr.bf16.mxu0 0
    %599 = vmatpush1.bf16.msra.mxu0 0
    %600 = vmatprep.subr.bf16.mxu0 0
    %601 = vmatpush1.bf16.msra.mxu0 0
    %602 = vmatprep.subr.bf16.mxu0 0
    %603 = vmatpush1.bf16.msra.mxu0 0
    %604 = vmatprep.subr.bf16.mxu0 0
    %605 = vmatpush1.bf16.msra.mxu0 0
    %606 = vmatprep.subr.bf16.mxu0 0
    %607 = vmatpush1.bf16.msra.mxu0 0
    %608 = vmatprep.subr.bf16.mxu0 0
    %609 = vmatpush1.bf16.msra.mxu0 0
    %610 = vmatprep.mubr.bf16.mxu0 0
    %611 = vmatmul.mubr.bf16.gmra.mrb[0].mxu0 %v576
    %v612 = vpop.f32.mrb[0].mxu0
    %v613 = vadd.f32 0.0, %v612
    %v614 = vpop.f32.mrb[0].mxu0
    %v615 = vpop.f32.mrb[0].mxu0
    %v616 = vpop.f32.mrb[0].mxu0
    %617 = vdwg.mxu0
    %619 = vrot.lane.b32.xlu0 %v613, 32
    %v620 = vpop.permute.xlu0 %619
    %vm622 = vcmask 523520
    %623 = vst.msk [vmem:[#allocation2] sm:$0xff] %vm622, %v620
    %624 = vrot.lane.b32.xlu0 %v304, 80
    %v625 = vpop.permute.xlu0 %624
    %v627 = vsel %vm313, %v304, 0
    %v630 = vsel %vm313, %v625, 0
    %632 = vmatprep.subr.bf16.mxu0 0
    %633 = vmatpush1.bf16.xpose.msra.mxu0 %v630
    %634 = vmatprep.subr.bf16.mxu0 0
    %635 = vmatpush1.bf16.xpose.msra.mxu0 0
    %636 = vmatprep.subr.bf16.mxu0 0
    %637 = vmatpush1.bf16.xpose.msra.mxu0 0
    %638 = vmatprep.subr.bf16.mxu0 0
    %639 = vmatpush1.bf16.xpose.msra.mxu0 0
    %640 = vmatprep.subr.bf16.mxu0 0
    %641 = vmatpush1.bf16.xpose.msra.mxu0 0
    %642 = vmatprep.subr.bf16.mxu0 0
    %643 = vmatpush1.bf16.xpose.msra.mxu0 0
    %644 = vmatprep.subr.bf16.mxu0 0
    %645 = vmatpush1.bf16.xpose.msra.mxu0 0
    %646 = vmatprep.subr.bf16.mxu0 0
    %647 = vmatpush1.bf16.xpose.msra.mxu0 0
    %648 = vmatprep.subr.bf16.mxu0 0
    %649 = vmatpush1.bf16.xpose.msra.mxu0 0
    %650 = vmatprep.subr.bf16.mxu0 0
    %651 = vmatpush1.bf16.xpose.msra.mxu0 0
    %652 = vmatprep.subr.bf16.mxu0 0
    %653 = vmatpush1.bf16.xpose.msra.mxu0 0
    %654 = vmatprep.subr.bf16.mxu0 0
    %655 = vmatpush1.bf16.xpose.msra.mxu0 0
    %656 = vmatprep.subr.bf16.mxu0 0
    %657 = vmatpush1.bf16.xpose.msra.mxu0 0
    %658 = vmatprep.subr.bf16.mxu0 0
    %659 = vmatpush1.bf16.xpose.msra.mxu0 0
    %660 = vmatprep.subr.bf16.mxu0 0
    %661 = vmatpush1.bf16.xpose.msra.mxu0 0
    %662 = vmatprep.subr.bf16.mxu0 0
    %663 = vmatpush1.bf16.xpose.msra.mxu0 0
    %664 = vmatprep.mubr.bf16.mxu0 0
    %665 = vmatmul.mubr.bf16.gmra.mrb[0].mxu0 %v627
    %v666 = vpop.f32.mrb[0].mxu0
    %v667 = vadd.f32 0.0, %v666
    %v668 = vpop.f32.mrb[0].mxu0
    %v669 = vpop.f32.mrb[0].mxu0
    %v670 = vpop.f32.mrb[0].mxu0
    %671 = vdwg.mxu0
    %672 = vrot.lane.b32.xlu0 %v303, 96
    %v673 = vpop.permute.xlu0 %672
    %674 = vrot.lane.b32.xlu0 %v303, 48
    %v675 = vpop.permute.xlu0 %674
    %v677 = vsel %vm313, %v673, 0
    %v680 = vsel %vm313, %v675, 0
    %682 = vmatprep.subr.bf16.mxu0 0
    %683 = vmatpush1.bf16.xpose.msra.mxu0 %v680
    %684 = vmatprep.subr.bf16.mxu0 0
    %685 = vmatpush1.bf16.xpose.msra.mxu0 0
    %686 = vmatprep.subr.bf16.mxu0 0
    %687 = vmatpush1.bf16.xpose.msra.mxu0 0
    %688 = vmatprep.subr.bf16.mxu0 0
    %689 = vmatpush1.bf16.xpose.msra.mxu0 0
    %690 = vmatprep.subr.bf16.mxu0 0
    %691 = vmatpush1.bf16.xpose.msra.mxu0 0
    %692 = vmatprep.subr.bf16.mxu0 0
    %693 = vmatpush1.bf16.xpose.msra.mxu0 0
    %694 = vmatprep.subr.bf16.mxu0 0
    %695 = vmatpush1.bf16.xpose.msra.mxu0 0
    %696 = vmatprep.subr.bf16.mxu0 0
    %697 = vmatpush1.bf16.xpose.msra.mxu0 0
    %698 = vmatprep.subr.bf16.mxu0 0
    %699 = vmatpush1.bf16.xpose.msra.mxu0 0
    %700 = vmatprep.subr.bf16.mxu0 0
    %701 = vmatpush1.bf16.xpose.msra.mxu0 0
    %702 = vmatprep.subr.bf16.mxu0 0
    %703 = vmatpush1.bf16.xpose.msra.mxu0 0
    %704 = vmatprep.subr.bf16.mxu0 0
    %705 = vmatpush1.bf16.xpose.msra.mxu0 0
    %706 = vmatprep.subr.bf16.mxu0 0
    %707 = vmatpush1.bf16.xpose.msra.mxu0 0
    %708 = vmatprep.subr.bf16.mxu0 0
    %709 = vmatpush1.bf16.xpose.msra.mxu0 0
    %710 = vmatprep.subr.bf16.mxu0 0
    %711 = vmatpush1.bf16.xpose.msra.mxu0 0
    %712 = vmatprep.subr.bf16.mxu0 0
    %713 = vmatpush1.bf16.xpose.msra.mxu0 0
    %714 = vmatprep.mubr.bf16.mxu0 0
    %715 = vmatmul.mubr.bf16.gmra.mrb[0].mxu0 %v677
    %v716 = vpop.f32.mrb[0].mxu0
    %v717 = vadd.f32 %v667, %v716
    %v718 = vpop.f32.mrb[0].mxu0
    %v719 = vpop.f32.mrb[0].mxu0
    %v720 = vpop.f32.mrb[0].mxu0
    %721 = vdwg.mxu0
    %v722 = vsel %vm409, %v717, -inf
    %723 = vmax.xlane.f32.xlu0 %v722
    %v724 = vpop.xlane.xlu0 %723
    %v725 = vsub.f32 %v717, %v724
    %v726 = vmul.f32 %v725, 1.442695
    %v727 = vpow.pop %v726
    %v728 = vsel %vm409, %v727, 0.0
    %729 = vadd.xlane.f32.xlu0 %v728
    %v730 = vpop.xlane.xlu0 %729
    %v731 = vrcp.pop %v730
    %v732 = vmul.f32 %v727, %v731
    %v733 = vpack.c.bf16 %v732, %v732
    %734 = vrot.lane.b32.xlu0 %v305, 32
    %v735 = vpop.permute.xlu0 %734
    %v737 = vsel %vm409, %v733, 0
    %v740 = vsel %vm428, %v735, 0
    %742 = vmatprep.subr.bf16.mxu0 0
    %743 = vmatpush1.bf16.msra.mxu0 %v740
    %744 = vmatprep.subr.bf16.mxu0 0
    %745 = vmatpush1.bf16.msra.mxu0 0
    %746 = vmatprep.subr.bf16.mxu0 0
    %747 = vmatpush1.bf16.msra.mxu0 0
    %748 = vmatprep.subr.bf16.mxu0 0
    %749 = vmatpush1.bf16.msra.mxu0 0
    %750 = vmatprep.subr.bf16.mxu0 0
    %751 = vmatpush1.bf16.msra.mxu0 0
    %752 = vmatprep.subr.bf16.mxu0 0
    %753 = vmatpush1.bf16.msra.mxu0 0
    %754 = vmatprep.subr.bf16.mxu0 0
    %755 = vmatpush1.bf16.msra.mxu0 0
    %756 = vmatprep.subr.bf16.mxu0 0
    %757 = vmatpush1.bf16.msra.mxu0 0
    %758 = vmatprep.subr.bf16.mxu0 0
    %759 = vmatpush1.bf16.msra.mxu0 0
    %760 = vmatprep.subr.bf16.mxu0 0
    %761 = vmatpush1.bf16.msra.mxu0 0
    %762 = vmatprep.subr.bf16.mxu0 0
    %763 = vmatpush1.bf16.msra.mxu0 0
    %764 = vmatprep.subr.bf16.mxu0 0
    %765 = vmatpush1.bf16.msra.mxu0 0
    %766 = vmatprep.subr.bf16.mxu0 0
    %767 = vmatpush1.bf16.msra.mxu0 0
    %768 = vmatprep.subr.bf16.mxu0 0
    %769 = vmatpush1.bf16.msra.mxu0 0
    %770 = vmatprep.subr.bf16.mxu0 0
    %771 = vmatpush1.bf16.msra.mxu0 0
    %772 = vmatprep.subr.bf16.mxu0 0
    %773 = vmatpush1.bf16.msra.mxu0 0
    %774 = vmatprep.mubr.bf16.mxu0 0
    %775 = vmatmul.mubr.bf16.gmra.mrb[0].mxu0 %v737
    %v776 = vpop.f32.mrb[0].mxu0
    %v777 = vadd.f32 0.0, %v776
    %v778 = vpop.f32.mrb[0].mxu0
    %v779 = vpop.f32.mrb[0].mxu0
    %v780 = vpop.f32.mrb[0].mxu0
    %781 = vdwg.mxu0
    %783 = vrot.lane.b32.xlu0 %v777, 64
    %v784 = vpop.permute.xlu0 %783
    %vm786 = vcmask 785920
    %787 = vst.msk [vmem:[#allocation2] sm:$0xff] %vm786, %v784
    %788 = vrot.lane.b32.xlu0 %v304, 112
    %v789 = vpop.permute.xlu0 %788
    %v791 = vsel %vm313, %v789, 0
    %793 = vmatprep.subr.bf16.mxu0 0
    %794 = vmatpush1.bf16.xpose.msra.mxu0 %v630
    %795 = vmatprep.subr.bf16.mxu0 0
    %796 = vmatpush1.bf16.xpose.msra.mxu0 0
    %797 = vmatprep.subr.bf16.mxu0 0
    %798 = vmatpush1.bf16.xpose.msra.mxu0 0
    %799 = vmatprep.subr.bf16.mxu0 0
    %800 = vmatpush1.bf16.xpose.msra.mxu0 0
    %801 = vmatprep.subr.bf16.mxu0 0
    %802 = vmatpush1.bf16.xpose.msra.mxu0 0
    %803 = vmatprep.subr.bf16.mxu0 0
    %804 = vmatpush1.bf16.xpose.msra.mxu0 0
    %805 = vmatprep.subr.bf16.mxu0 0
    %806 = vmatpush1.bf16.xpose.msra.mxu0 0
    %807 = vmatprep.subr.bf16.mxu0 0
    %808 = vmatpush1.bf16.xpose.msra.mxu0 0
    %809 = vmatprep.subr.bf16.mxu0 0
    %810 = vmatpush1.bf16.xpose.msra.mxu0 0
    %811 = vmatprep.subr.bf16.mxu0 0
    %812 = vmatpush1.bf16.xpose.msra.mxu0 0
    %813 = vmatprep.subr.bf16.mxu0 0
    %814 = vmatpush1.bf16.xpose.msra.mxu0 0
    %815 = vmatprep.subr.bf16.mxu0 0
    %816 = vmatpush1.bf16.xpose.msra.mxu0 0
    %817 = vmatprep.subr.bf16.mxu0 0
    %818 = vmatpush1.bf16.xpose.msra.mxu0 0
    %819 = vmatprep.subr.bf16.mxu0 0
    %820 = vmatpush1.bf16.xpose.msra.mxu0 0
    %821 = vmatprep.subr.bf16.mxu0 0
    %822 = vmatpush1.bf16.xpose.msra.mxu0 0
    %823 = vmatprep.subr.bf16.mxu0 0
    %824 = vmatpush1.bf16.xpose.msra.mxu0 0
    %825 = vmatprep.mubr.bf16.mxu0 0
    %826 = vmatmul.mubr.bf16.gmra.mrb[0].mxu0 %v791
    %v827 = vpop.f32.mrb[0].mxu0
    %v828 = vadd.f32 0.0, %v827
    %v829 = vpop.f32.mrb[0].mxu0
    %v830 = vpop.f32.mrb[0].mxu0
    %v831 = vpop.f32.mrb[0].mxu0
    %832 = vdwg.mxu0
    %833 = vrot.lane.b32.xlu0 %v303, 80
    %v834 = vpop.permute.xlu0 %833
    %v836 = vsel %vm313, %v834, 0
    %838 = vmatprep.subr.bf16.mxu0 0
    %839 = vmatpush1.bf16.xpose.msra.mxu0 %v680
    %840 = vmatprep.subr.bf16.mxu0 0
    %841 = vmatpush1.bf16.xpose.msra.mxu0 0
    %842 = vmatprep.subr.bf16.mxu0 0
    %843 = vmatpush1.bf16.xpose.msra.mxu0 0
    %844 = vmatprep.subr.bf16.mxu0 0
    %845 = vmatpush1.bf16.xpose.msra.mxu0 0
    %846 = vmatprep.subr.bf16.mxu0 0
    %847 = vmatpush1.bf16.xpose.msra.mxu0 0
    %848 = vmatprep.subr.bf16.mxu0 0
    %849 = vmatpush1.bf16.xpose.msra.mxu0 0
    %850 = vmatprep.subr.bf16.mxu0 0
    %851 = vmatpush1.bf16.xpose.msra.mxu0 0
    %852 = vmatprep.subr.bf16.mxu0 0
    %853 = vmatpush1.bf16.xpose.msra.mxu0 0
    %854 = vmatprep.subr.bf16.mxu0 0
    %855 = vmatpush1.bf16.xpose.msra.mxu0 0
    %856 = vmatprep.subr.bf16.mxu0 0
    %857 = vmatpush1.bf16.xpose.msra.mxu0 0
    %858 = vmatprep.subr.bf16.mxu0 0
    %859 = vmatpush1.bf16.xpose.msra.mxu0 0
    %860 = vmatprep.subr.bf16.mxu0 0
    %861 = vmatpush1.bf16.xpose.msra.mxu0 0
    %862 = vmatprep.subr.bf16.mxu0 0
    %863 = vmatpush1.bf16.xpose.msra.mxu0 0
    %864 = vmatprep.subr.bf16.mxu0 0
    %865 = vmatpush1.bf16.xpose.msra.mxu0 0
    %866 = vmatprep.subr.bf16.mxu0 0
    %867 = vmatpush1.bf16.xpose.msra.mxu0 0
    %868 = vmatprep.subr.bf16.mxu0 0
    %869 = vmatpush1.bf16.xpose.msra.mxu0 0
    %870 = vmatprep.mubr.bf16.mxu0 0
    %871 = vmatmul.mubr.bf16.gmra.mrb[0].mxu0 %v836
    %v872 = vpop.f32.mrb[0].mxu0
    %v873 = vadd.f32 %v828, %v872
    %v874 = vpop.f32.mrb[0].mxu0
    %v875 = vpop.f32.mrb[0].mxu0
    %v876 = vpop.f32.mrb[0].mxu0
    %877 = vdwg.mxu0
    %v878 = vsel %vm409, %v873, -inf
    %879 = vmax.xlane.f32.xlu0 %v878
    %v880 = vpop.xlane.xlu0 %879
    %v881 = vsub.f32 %v873, %v880
    %v882 = vmul.f32 %v881, 1.442695
    %v883 = vpow.pop %v882
    %v884 = vsel %vm409, %v883, 0.0
    %885 = vadd.xlane.f32.xlu0 %v884
    %v886 = vpop.xlane.xlu0 %885
    %v887 = vrcp.pop %v886
    %v888 = vmul.f32 %v883, %v887
    %v889 = vpack.c.bf16 %v888, %v888
    %v891 = vsel %vm409, %v889, 0
    %893 = vmatprep.subr.bf16.mxu0 0
    %894 = vmatpush1.bf16.msra.mxu0 %v740
    %895 = vmatprep.subr.bf16.mxu0 0
    %896 = vmatpush1.bf16.msra.mxu0 0
    %897 = vmatprep.subr.bf16.mxu0 0
    %898 = vmatpush1.bf16.msra.mxu0 0
    %899 = vmatprep.subr.bf16.mxu0 0
    %900 = vmatpush1.bf16.msra.mxu0 0
    %901 = vmatprep.subr.bf16.mxu0 0
    %902 = vmatpush1.bf16.msra.mxu0 0
    %903 = vmatprep.subr.bf16.mxu0 0
    %904 = vmatpush1.bf16.msra.mxu0 0
    %905 = vmatprep.subr.bf16.mxu0 0
    %906 = vmatpush1.bf16.msra.mxu0 0
    %907 = vmatprep.subr.bf16.mxu0 0
    %908 = vmatpush1.bf16.msra.mxu0 0
    %909 = vmatprep.subr.bf16.mxu0 0
    %910 = vmatpush1.bf16.msra.mxu0 0
    %911 = vmatprep.subr.bf16.mxu0 0
    %912 = vmatpush1.bf16.msra.mxu0 0
    %913 = vmatprep.subr.bf16.mxu0 0
    %914 = vmatpush1.bf16.msra.mxu0 0
    %915 = vmatprep.subr.bf16.mxu0 0
    %916 = vmatpush1.bf16.msra.mxu0 0
    %917 = vmatprep.subr.bf16.mxu0 0
    %918 = vmatpush1.bf16.msra.mxu0 0
    %919 = vmatprep.subr.bf16.mxu0 0
    %920 = vmatpush1.bf16.msra.mxu0 0
    %921 = vmatprep.subr.bf16.mxu0 0
    %922 = vmatpush1.bf16.msra.mxu0 0
    %923 = vmatprep.subr.bf16.mxu0 0
    %924 = vmatpush1.bf16.msra.mxu0 0
    %925 = vmatprep.mubr.bf16.mxu0 0
    %926 = vmatmul.mubr.bf16.gmra.mrb[0].mxu0 %v891
    %v927 = vpop.f32.mrb[0].mxu0
    %v928 = vadd.f32 0.0, %v927
    %v929 = vpop.f32.mrb[0].mxu0
    %v930 = vpop.f32.mrb[0].mxu0
    %v931 = vpop.f32.mrb[0].mxu0
    %932 = vdwg.mxu0
    %934 = vrot.lane.b32.xlu0 %v928, 96
    %v935 = vpop.permute.xlu0 %934
    %vm937 = vcmask 1048320
    %938 = vst.msk [vmem:[#allocation2] sm:$0xff] %vm937, %v935
    %v939 = vpack.c.bf16 %v272, %v272
    %v940 = vpack.c.bf16 %v302, %v302
    %v941 = vpack.c.bf16 %v230, %v230
    %v942 = vpack.c.bf16 %v301, %v301
    %944 = vrot.lane.b32.xlu0 %v942, 32
    %v945 = vpop.permute.xlu0 %944
    %947 = vrot.lane.b32.xlu0 %v940, 96
    %v948 = vpop.permute.xlu0 %947
    %v950 = vsel %vm313, %v945, 0
    %v953 = vsel %vm313, %v948, 0
    %955 = vmatprep.subr.bf16.mxu0 0
    %956 = vmatpush1.bf16.xpose.msra.mxu0 %v953
    %957 = vmatprep.subr.bf16.mxu0 0
    %958 = vmatpush1.bf16.xpose.msra.mxu0 0
    %959 = vmatprep.subr.bf16.mxu0 0
    %960 = vmatpush1.bf16.xpose.msra.mxu0 0
    %961 = vmatprep.subr.bf16.mxu0 0
    %962 = vmatpush1.bf16.xpose.msra.mxu0 0
    %963 = vmatprep.subr.bf16.mxu0 0
    %964 = vmatpush1.bf16.xpose.msra.mxu0 0
    %965 = vmatprep.subr.bf16.mxu0 0
    %966 = vmatpush1.bf16.xpose.msra.mxu0 0
    %967 = vmatprep.subr.bf16.mxu0 0
    %968 = vmatpush1.bf16.xpose.msra.mxu0 0
    %969 = vmatprep.subr.bf16.mxu0 0
    %970 = vmatpush1.bf16.xpose.msra.mxu0 0
    %971 = vmatprep.subr.bf16.mxu0 0
    %972 = vmatpush1.bf16.xpose.msra.mxu0 0
    %973 = vmatprep.subr.bf16.mxu0 0
    %974 = vmatpush1.bf16.xpose.msra.mxu0 0
    %975 = vmatprep.subr.bf16.mxu0 0
    %976 = vmatpush1.bf16.xpose.msra.mxu0 0
    %977 = vmatprep.subr.bf16.mxu0 0
    %978 = vmatpush1.bf16.xpose.msra.mxu0 0
    %979 = vmatprep.subr.bf16.mxu0 0
    %980 = vmatpush1.bf16.xpose.msra.mxu0 0
    %981 = vmatprep.subr.bf16.mxu0 0
    %982 = vmatpush1.bf16.xpose.msra.mxu0 0
    %983 = vmatprep.subr.bf16.mxu0 0
    %984 = vmatpush1.bf16.xpose.msra.mxu0 0
    %985 = vmatprep.subr.bf16.mxu0 0
    %986 = vmatpush1.bf16.xpose.msra.mxu0 0
    %987 = vmatprep.mubr.bf16.mxu0 0
    %988 = vmatmul.mubr.bf16.gmra.mrb[0].mxu0 %v950
    %v989 = vpop.f32.mrb[0].mxu0
    %v990 = vadd.f32 0.0, %v989
    %v991 = vpop.f32.mrb[0].mxu0
    %v992 = vpop.f32.mrb[0].mxu0
    %v993 = vpop.f32.mrb[0].mxu0
    %994 = vdwg.mxu0
    %996 = vrot.lane.b32.xlu0 %v939, 64
    %v997 = vpop.permute.xlu0 %996
    %v999 = vsel %vm313, %v939, 0
    %v1002 = vsel %vm313, %v997, 0
    %1004 = vmatprep.subr.bf16.mxu0 0
    %1005 = vmatpush1.bf16.xpose.msra.mxu0 %v1002
    %1006 = vmatprep.subr.bf16.mxu0 0
    %1007 = vmatpush1.bf16.xpose.msra.mxu0 0
    %1008 = vmatprep.subr.bf16.mxu0 0
    %1009 = vmatpush1.bf16.xpose.msra.mxu0 0
    %1010 = vmatprep.subr.bf16.mxu0 0
    %1011 = vmatpush1.bf16.xpose.msra.mxu0 0
    %1012 = vmatprep.subr.bf16.mxu0 0
    %1013 = vmatpush1.bf16.xpose.msra.mxu0 0
    %1014 = vmatprep.subr.bf16.mxu0 0
    %1015 = vmatpush1.bf16.xpose.msra.mxu0 0
    %1016 = vmatprep.subr.bf16.mxu0 0
    %1017 = vmatpush1.bf16.xpose.msra.mxu0 0
    %1018 = vmatprep.subr.bf16.mxu0 0
    %1019 = vmatpush1.bf16.xpose.msra.mxu0 0
    %1020 = vmatprep.subr.bf16.mxu0 0
    %1021 = vmatpush1.bf16.xpose.msra.mxu0 0
    %1022 = vmatprep.subr.bf16.mxu0 0
    %1023 = vmatpush1.bf16.xpose.msra.mxu0 0
    %1024 = vmatprep.subr.bf16.mxu0 0
    %1025 = vmatpush1.bf16.xpose.msra.mxu0 0
    %1026 = vmatprep.subr.bf16.mxu0 0
    %1027 = vmatpush1.bf16.xpose.msra.mxu0 0
    %1028 = vmatprep.subr.bf16.mxu0 0
    %1029 = vmatpush1.bf16.xpose.msra.mxu0 0
    %1030 = vmatprep.subr.bf16.mxu0 0
    %1031 = vmatpush1.bf16.xpose.msra.mxu0 0
    %1032 = vmatprep.subr.bf16.mxu0 0
    %1033 = vmatpush1.bf16.xpose.msra.mxu0 0
    %1034 = vmatprep.subr.bf16.mxu0 0
    %1035 = vmatpush1.bf16.xpose.msra.mxu0 0
    %1036 = vmatprep.mubr.bf16.mxu0 0
    %1037 = vmatmul.mubr.bf16.gmra.mrb[0].mxu0 %v999
    %v1038 = vpop.f32.mrb[0].mxu0
    %v1039 = vadd.f32 %v990, %v1038
    %v1040 = vpop.f32.mrb[0].mxu0
    %v1041 = vpop.f32.mrb[0].mxu0
    %v1042 = vpop.f32.mrb[0].mxu0
    %1043 = vdwg.mxu0
    %v1044 = vsel %vm409, %v1039, -inf
    %1045 = vmax.xlane.f32.xlu0 %v1044
    %v1046 = vpop.xlane.xlu0 %1045
    %v1047 = vsub.f32 %v1039, %v1046
    %v1048 = vmul.f32 %v1047, 1.442695
    %v1049 = vpow.pop %v1048
    %v1050 = vsel %vm409, %v1049, 0.0
    %1051 = vadd.xlane.f32.xlu0 %v1050
    %v1052 = vpop.xlane.xlu0 %1051
    %v1053 = vrcp.pop %v1052
    %v1054 = vmul.f32 %v1049, %v1053
    %v1055 = vpack.c.bf16 %v1054, %v1054
    %1057 = vrot.lane.b32.xlu0 %v941, 64
    %v1058 = vpop.permute.xlu0 %1057
    %v1060 = vsel %vm409, %v1055, 0
    %v1063 = vsel %vm428, %v1058, 0
    %1065 = vmatprep.subr.bf16.mxu0 0
    %1066 = vmatpush1.bf16.msra.mxu0 %v1063
    %1067 = vmatprep.subr.bf16.mxu0 0
    %1068 = vmatpush1.bf16.msra.mxu0 0
    %1069 = vmatprep.subr.bf16.mxu0 0
    %1070 = vmatpush1.bf16.msra.mxu0 0
    %1071 = vmatprep.subr.bf16.mxu0 0
    %1072 = vmatpush1.bf16.msra.mxu0 0
    %1073 = vmatprep.subr.bf16.mxu0 0
    %1074 = vmatpush1.bf16.msra.mxu0 0
    %1075 = vmatprep.subr.bf16.mxu0 0
    %1076 = vmatpush1.bf16.msra.mxu0 0
    %1077 = vmatprep.subr.bf16.mxu0 0
    %1078 = vmatpush1.bf16.msra.mxu0 0
    %1079 = vmatprep.subr.bf16.mxu0 0
    %1080 = vmatpush1.bf16.msra.mxu0 0
    %1081 = vmatprep.subr.bf16.mxu0 0
    %1082 = vmatpush1.bf16.msra.mxu0 0
    %1083 = vmatprep.subr.bf16.mxu0 0
    %1084 = vmatpush1.bf16.msra.mxu0 0
    %1085 = vmatprep.subr.bf16.mxu0 0
    %1086 = vmatpush1.bf16.msra.mxu0 0
    %1087 = vmatprep.subr.bf16.mxu0 0
    %1088 = vmatpush1.bf16.msra.mxu0 0
    %1089 = vmatprep.subr.bf16.mxu0 0
    %1090 = vmatpush1.bf16.msra.mxu0 0
    %1091 = vmatprep.subr.bf16.mxu0 0
    %1092 = vmatpush1.bf16.msra.mxu0 0
    %1093 = vmatprep.subr.bf16.mxu0 0
    %1094 = vmatpush1.bf16.msra.mxu0 0
    %1095 = vmatprep.subr.bf16.mxu0 0
    %1096 = vmatpush1.bf16.msra.mxu0 0
    %1097 = vmatprep.mubr.bf16.mxu0 0
    %1098 = vmatmul.mubr.bf16.gmra.mrb[0].mxu0 %v1060
    %v1099 = vpop.f32.mrb[0].mxu0
    %v1100 = vadd.f32 0.0, %v1099
    %v1101 = vpop.f32.mrb[0].mxu0
    %v1102 = vpop.f32.mrb[0].mxu0
    %v1103 = vpop.f32.mrb[0].mxu0
    %1104 = vdwg.mxu0
    %1105 = vst.msk [vmem:[#allocation2 + $0x8] sm:$0xff] %vm266, %v1100
    %1106 = vrot.lane.b32.xlu0 %v942, 16
    %v1107 = vpop.permute.xlu0 %1106
    %v1109 = vsel %vm313, %v1107, 0
    %1111 = vmatprep.subr.bf16.mxu0 0
    %1112 = vmatpush1.bf16.xpose.msra.mxu0 %v953
    %1113 = vmatprep.subr.bf16.mxu0 0
    %1114 = vmatpush1.bf16.xpose.msra.mxu0 0
    %1115 = vmatprep.subr.bf16.mxu0 0
    %1116 = vmatpush1.bf16.xpose.msra.mxu0 0
    %1117 = vmatprep.subr.bf16.mxu0 0
    %1118 = vmatpush1.bf16.xpose.msra.mxu0 0
    %1119 = vmatprep.subr.bf16.mxu0 0
    %1120 = vmatpush1.bf16.xpose.msra.mxu0 0
    %1121 = vmatprep.subr.bf16.mxu0 0
    %1122 = vmatpush1.bf16.xpose.msra.mxu0 0
    %1123 = vmatprep.subr.bf16.mxu0 0
    %1124 = vmatpush1.bf16.xpose.msra.mxu0 0
    %1125 = vmatprep.subr.bf16.mxu0 0
    %1126 = vmatpush1.bf16.xpose.msra.mxu0 0
    %1127 = vmatprep.subr.bf16.mxu0 0
    %1128 = vmatpush1.bf16.xpose.msra.mxu0 0
    %1129 = vmatprep.subr.bf16.mxu0 0
    %1130 = vmatpush1.bf16.xpose.msra.mxu0 0
    %1131 = vmatprep.subr.bf16.mxu0 0
    %1132 = vmatpush1.bf16.xpose.msra.mxu0 0
    %1133 = vmatprep.subr.bf16.mxu0 0
    %1134 = vmatpush1.bf16.xpose.msra.mxu0 0
    %1135 = vmatprep.subr.bf16.mxu0 0
    %1136 = vmatpush1.bf16.xpose.msra.mxu0 0
    %1137 = vmatprep.subr.bf16.mxu0 0
    %1138 = vmatpush1.bf16.xpose.msra.mxu0 0
    %1139 = vmatprep.subr.bf16.mxu0 0
    %1140 = vmatpush1.bf16.xpose.msra.mxu0 0
    %1141 = vmatprep.subr.bf16.mxu0 0
    %1142 = vmatpush1.bf16.xpose.msra.mxu0 0
    %1143 = vmatprep.mubr.bf16.mxu0 0
    %1144 = vmatmul.mubr.bf16.gmra.mrb[0].mxu0 %v1109
    %v1145 = vpop.f32.mrb[0].mxu0
    %v1146 = vadd.f32 0.0, %v1145
    %v1147 = vpop.f32.mrb[0].mxu0
    %v1148 = vpop.f32.mrb[0].mxu0
    %v1149 = vpop.f32.mrb[0].mxu0
    %1150 = vdwg.mxu0
    %1151 = vrot.lane.b32.xlu0 %v939, 112
    %v1152 = vpop.permute.xlu0 %1151
    %v1154 = vsel %vm313, %v1152, 0
    %1156 = vmatprep.subr.bf16.mxu0 0
    %1157 = vmatpush1.bf16.xpose.msra.mxu0 %v1002
    %1158 = vmatprep.subr.bf16.mxu0 0
    %1159 = vmatpush1.bf16.xpose.msra.mxu0 0
    %1160 = vmatprep.subr.bf16.mxu0 0
    %1161 = vmatpush1.bf16.xpose.msra.mxu0 0
    %1162 = vmatprep.subr.bf16.mxu0 0
    %1163 = vmatpush1.bf16.xpose.msra.mxu0 0
    %1164 = vmatprep.subr.bf16.mxu0 0
    %1165 = vmatpush1.bf16.xpose.msra.mxu0 0
    %1166 = vmatprep.subr.bf16.mxu0 0
    %1167 = vmatpush1.bf16.xpose.msra.mxu0 0
    %1168 = vmatprep.subr.bf16.mxu0 0
    %1169 = vmatpush1.bf16.xpose.msra.mxu0 0
    %1170 = vmatprep.subr.bf16.mxu0 0
    %1171 = vmatpush1.bf16.xpose.msra.mxu0 0
    %1172 = vmatprep.subr.bf16.mxu0 0
    %1173 = vmatpush1.bf16.xpose.msra.mxu0 0
    %1174 = vmatprep.subr.bf16.mxu0 0
    %1175 = vmatpush1.bf16.xpose.msra.mxu0 0
    %1176 = vmatprep.subr.bf16.mxu0 0
    %1177 = vmatpush1.bf16.xpose.msra.mxu0 0
    %1178 = vmatprep.subr.bf16.mxu0 0
    %1179 = vmatpush1.bf16.xpose.msra.mxu0 0
    %1180 = vmatprep.subr.bf16.mxu0 0
    %1181 = vmatpush1.bf16.xpose.msra.mxu0 0
    %1182 = vmatprep.subr.bf16.mxu0 0
    %1183 = vmatpush1.bf16.xpose.msra.mxu0 0
    %1184 = vmatprep.subr.bf16.mxu0 0
    %1185 = vmatpush1.bf16.xpose.msra.mxu0 0
    %1186 = vmatprep.subr.bf16.mxu0 0
    %1187 = vmatpush1.bf16.xpose.msra.mxu0 0
    %1188 = vmatprep.mubr.bf16.mxu0 0
    %1189 = vmatmul.mubr.bf16.gmra.mrb[0].mxu0 %v1154
    %v1190 = vpop.f32.mrb[0].mxu0
    %v1191 = vadd.f32 %v1146, %v1190
    %v1192 = vpop.f32.mrb[0].mxu0
    %v1193 = vpop.f32.mrb[0].mxu0
    %v1194 = vpop.f32.mrb[0].mxu0
    %1195 = vdwg.mxu0
    %v1196 = vsel %vm409, %v1191, -inf
    %1197 = vmax.xlane.f32.xlu0 %v1196
    %v1198 = vpop.xlane.xlu0 %1197
    %v1199 = vsub.f32 %v1191, %v1198
    %v1200 = vmul.f32 %v1199, 1.442695
    %v1201 = vpow.pop %v1200
    %v1202 = vsel %vm409, %v1201, 0.0
    %1203 = vadd.xlane.f32.xlu0 %v1202
    %v1204 = vpop.xlane.xlu0 %1203
    %v1205 = vrcp.pop %v1204
    %v1206 = vmul.f32 %v1201, %v1205
    %v1207 = vpack.c.bf16 %v1206, %v1206
    %v1209 = vsel %vm409, %v1207, 0
    %1211 = vmatprep.subr.bf16.mxu0 0
    %1212 = vmatpush1.bf16.msra.mxu0 %v1063
    %1213 = vmatprep.subr.bf16.mxu0 0
    %1214 = vmatpush1.bf16.msra.mxu0 0
    %1215 = vmatprep.subr.bf16.mxu0 0
    %1216 = vmatpush1.bf16.msra.mxu0 0
    %1217 = vmatprep.subr.bf16.mxu0 0
    %1218 = vmatpush1.bf16.msra.mxu0 0
    %1219 = vmatprep.subr.bf16.mxu0 0
    %1220 = vmatpush1.bf16.msra.mxu0 0
    %1221 = vmatprep.subr.bf16.mxu0 0
    %1222 = vmatpush1.bf16.msra.mxu0 0
    %1223 = vmatprep.subr.bf16.mxu0 0
    %1224 = vmatpush1.bf16.msra.mxu0 0
    %1225 = vmatprep.subr.bf16.mxu0 0
    %1226 = vmatpush1.bf16.msra.mxu0 0
    %1227 = vmatprep.subr.bf16.mxu0 0
    %1228 = vmatpush1.bf16.msra.mxu0 0
    %1229 = vmatprep.subr.bf16.mxu0 0
    %1230 = vmatpush1.bf16.msra.mxu0 0
    %1231 = vmatprep.subr.bf16.mxu0 0
    %1232 = vmatpush1.bf16.msra.mxu0 0
    %1233 = vmatprep.subr.bf16.mxu0 0
    %1234 = vmatpush1.bf16.msra.mxu0 0
    %1235 = vmatprep.subr.bf16.mxu0 0
    %1236 = vmatpush1.bf16.msra.mxu0 0
    %1237 = vmatprep.subr.bf16.mxu0 0
    %1238 = vmatpush1.bf16.msra.mxu0 0
    %1239 = vmatprep.subr.bf16.mxu0 0
    %1240 = vmatpush1.bf16.msra.mxu0 0
    %1241 = vmatprep.subr.bf16.mxu0 0
    %1242 = vmatpush1.bf16.msra.mxu0 0
    %1243 = vmatprep.mubr.bf16.mxu0 0
    %1244 = vmatmul.mubr.bf16.gmra.mrb[0].mxu0 %v1209
    %v1245 = vpop.f32.mrb[0].mxu0
    %v1246 = vadd.f32 0.0, %v1245
    %v1247 = vpop.f32.mrb[0].mxu0
    %v1248 = vpop.f32.mrb[0].mxu0
    %v1249 = vpop.f32.mrb[0].mxu0
    %1250 = vdwg.mxu0
    %1252 = vrot.lane.b32.xlu0 %v1246, 32
    %v1253 = vpop.permute.xlu0 %1252
    %1255 = vst.msk [vmem:[#allocation2 + $0x8] sm:$0xff] %vm622, %v1253
    %1256 = vrot.lane.b32.xlu0 %v940, 80
    %v1257 = vpop.permute.xlu0 %1256
    %v1259 = vsel %vm313, %v940, 0
    %v1262 = vsel %vm313, %v1257, 0
    %1264 = vmatprep.subr.bf16.mxu0 0
    %1265 = vmatpush1.bf16.xpose.msra.mxu0 %v1262
    %1266 = vmatprep.subr.bf16.mxu0 0
    %1267 = vmatpush1.bf16.xpose.msra.mxu0 0
    %1268 = vmatprep.subr.bf16.mxu0 0
    %1269 = vmatpush1.bf16.xpose.msra.mxu0 0
    %1270 = vmatprep.subr.bf16.mxu0 0
    %1271 = vmatpush1.bf16.xpose.msra.mxu0 0
    %1272 = vmatprep.subr.bf16.mxu0 0
    %1273 = vmatpush1.bf16.xpose.msra.mxu0 0
    %1274 = vmatprep.subr.bf16.mxu0 0
    %1275 = vmatpush1.bf16.xpose.msra.mxu0 0
    %1276 = vmatprep.subr.bf16.mxu0 0
    %1277 = vmatpush1.bf16.xpose.msra.mxu0 0
    %1278 = vmatprep.subr.bf16.mxu0 0
    %1279 = vmatpush1.bf16.xpose.msra.mxu0 0
    %1280 = vmatprep.subr.bf16.mxu0 0
    %1281 = vmatpush1.bf16.xpose.msra.mxu0 0
    %1282 = vmatprep.subr.bf16.mxu0 0
    %1283 = vmatpush1.bf16.xpose.msra.mxu0 0
    %1284 = vmatprep.subr.bf16.mxu0 0
    %1285 = vmatpush1.bf16.xpose.msra.mxu0 0
    %1286 = vmatprep.subr.bf16.mxu0 0
    %1287 = vmatpush1.bf16.xpose.msra.mxu0 0
    %1288 = vmatprep.subr.bf16.mxu0 0
    %1289 = vmatpush1.bf16.xpose.msra.mxu0 0
    %1290 = vmatprep.subr.bf16.mxu0 0
    %1291 = vmatpush1.bf16.xpose.msra.mxu0 0
    %1292 = vmatprep.subr.bf16.mxu0 0
    %1293 = vmatpush1.bf16.xpose.msra.mxu0 0
    %1294 = vmatprep.subr.bf16.mxu0 0
    %1295 = vmatpush1.bf16.xpose.msra.mxu0 0
    %1296 = vmatprep.mubr.bf16.mxu0 0
    %1297 = vmatmul.mubr.bf16.gmra.mrb[0].mxu0 %v1259
    %v1298 = vpop.f32.mrb[0].mxu0
    %v1299 = vadd.f32 0.0, %v1298
    %v1300 = vpop.f32.mrb[0].mxu0
    %v1301 = vpop.f32.mrb[0].mxu0
    %v1302 = vpop.f32.mrb[0].mxu0
    %1303 = vdwg.mxu0
    %1304 = vrot.lane.b32.xlu0 %v939, 96
    %v1305 = vpop.permute.xlu0 %1304
    %1306 = vrot.lane.b32.xlu0 %v939, 48
    %v1307 = vpop.permute.xlu0 %1306
    %v1309 = vsel %vm313, %v1305, 0
    %v1312 = vsel %vm313, %v1307, 0
    %1314 = vmatprep.subr.bf16.mxu0 0
    %1315 = vmatpush1.bf16.xpose.msra.mxu0 %v1312
    %1316 = vmatprep.subr.bf16.mxu0 0
    %1317 = vmatpush1.bf16.xpose.msra.mxu0 0
    %1318 = vmatprep.subr.bf16.mxu0 0
    %1319 = vmatpush1.bf16.xpose.msra.mxu0 0
    %1320 = vmatprep.subr.bf16.mxu0 0
    %1321 = vmatpush1.bf16.xpose.msra.mxu0 0
    %1322 = vmatprep.subr.bf16.mxu0 0
    %1323 = vmatpush1.bf16.xpose.msra.mxu0 0
    %1324 = vmatprep.subr.bf16.mxu0 0
    %1325 = vmatpush1.bf16.xpose.msra.mxu0 0
    %1326 = vmatprep.subr.bf16.mxu0 0
    %1327 = vmatpush1.bf16.xpose.msra.mxu0 0
    %1328 = vmatprep.subr.bf16.mxu0 0
    %1329 = vmatpush1.bf16.xpose.msra.mxu0 0
    %1330 = vmatprep.subr.bf16.mxu0 0
    %1331 = vmatpush1.bf16.xpose.msra.mxu0 0
    %1332 = vmatprep.subr.bf16.mxu0 0
    %1333 = vmatpush1.bf16.xpose.msra.mxu0 0
    %1334 = vmatprep.subr.bf16.mxu0 0
    %1335 = vmatpush1.bf16.xpose.msra.mxu0 0
    %1336 = vmatprep.subr.bf16.mxu0 0
    %1337 = vmatpush1.bf16.xpose.msra.mxu0 0
    %1338 = vmatprep.subr.bf16.mxu0 0
    %1339 = vmatpush1.bf16.xpose.msra.mxu0 0
    %1340 = vmatprep.subr.bf16.mxu0 0
    %1341 = vmatpush1.bf16.xpose.msra.mxu0 0
    %1342 = vmatprep.subr.bf16.mxu0 0
    %1343 = vmatpush1.bf16.xpose.msra.mxu0 0
    %1344 = vmatprep.subr.bf16.mxu0 0
    %1345 = vmatpush1.bf16.xpose.msra.mxu0 0
    %1346 = vmatprep.mubr.bf16.mxu0 0
    %1347 = vmatmul.mubr.bf16.gmra.mrb[0].mxu0 %v1309
    %v1348 = vpop.f32.mrb[0].mxu0
    %v1349 = vadd.f32 %v1299, %v1348
    %v1350 = vpop.f32.mrb[0].mxu0
    %v1351 = vpop.f32.mrb[0].mxu0
    %v1352 = vpop.f32.mrb[0].mxu0
    %1353 = vdwg.mxu0
    %v1354 = vsel %vm409, %v1349, -inf
    %1355 = vmax.xlane.f32.xlu0 %v1354
    %v1356 = vpop.xlane.xlu0 %1355
    %v1357 = vsub.f32 %v1349, %v1356
    %v1358 = vmul.f32 %v1357, 1.442695
    %v1359 = vpow.pop %v1358
    %v1360 = vsel %vm409, %v1359, 0.0
    %1361 = vadd.xlane.f32.xlu0 %v1360
    %v1362 = vpop.xlane.xlu0 %1361
    %v1363 = vrcp.pop %v1362
    %v1364 = vmul.f32 %v1359, %v1363
    %v1365 = vpack.c.bf16 %v1364, %v1364
    %1366 = vrot.lane.b32.xlu0 %v941, 32
    %v1367 = vpop.permute.xlu0 %1366
    %v1369 = vsel %vm409, %v1365, 0
    %v1372 = vsel %vm428, %v1367, 0
    %1374 = vmatprep.subr.bf16.mxu0 0
    %1375 = vmatpush1.bf16.msra.mxu0 %v1372
    %1376 = vmatprep.subr.bf16.mxu0 0
    %1377 = vmatpush1.bf16.msra.mxu0 0
    %1378 = vmatprep.subr.bf16.mxu0 0
    %1379 = vmatpush1.bf16.msra.mxu0 0
    %1380 = vmatprep.subr.bf16.mxu0 0
    %1381 = vmatpush1.bf16.msra.mxu0 0
    %1382 = vmatprep.subr.bf16.mxu0 0
    %1383 = vmatpush1.bf16.msra.mxu0 0
    %1384 = vmatprep.subr.bf16.mxu0 0
    %1385 = vmatpush1.bf16.msra.mxu0 0
    %1386 = vmatprep.subr.bf16.mxu0 0
    %1387 = vmatpush1.bf16.msra.mxu0 0
    %1388 = vmatprep.subr.bf16.mxu0 0
    %1389 = vmatpush1.bf16.msra.mxu0 0
    %1390 = vmatprep.subr.bf16.mxu0 0
    %1391 = vmatpush1.bf16.msra.mxu0 0
    %1392 = vmatprep.subr.bf16.mxu0 0
    %1393 = vmatpush1.bf16.msra.mxu0 0
    %1394 = vmatprep.subr.bf16.mxu0 0
    %1395 = vmatpush1.bf16.msra.mxu0 0
    %1396 = vmatprep.subr.bf16.mxu0 0
    %1397 = vmatpush1.bf16.msra.mxu0 0
    %1398 = vmatprep.subr.bf16.mxu0 0
    %1399 = vmatpush1.bf16.msra.mxu0 0
    %1400 = vmatprep.subr.bf16.mxu0 0
    %1401 = vmatpush1.bf16.msra.mxu0 0
    %1402 = vmatprep.subr.bf16.mxu0 0
    %1403 = vmatpush1.bf16.msra.mxu0 0
    %1404 = vmatprep.subr.bf16.mxu0 0
    %1405 = vmatpush1.bf16.msra.mxu0 0
    %1406 = vmatprep.mubr.bf16.mxu0 0
    %1407 = vmatmul.mubr.bf16.gmra.mrb[0].mxu0 %v1369
    %v1408 = vpop.f32.mrb[0].mxu0
    %v1409 = vadd.f32 0.0, %v1408
    %v1410 = vpop.f32.mrb[0].mxu0
    %v1411 = vpop.f32.mrb[0].mxu0
    %v1412 = vpop.f32.mrb[0].mxu0
    %1413 = vdwg.mxu0
    %1415 = vrot.lane.b32.xlu0 %v1409, 64
    %v1416 = vpop.permute.xlu0 %1415
    %1418 = vst.msk [vmem:[#allocation2 + $0x8] sm:$0xff] %vm786, %v1416
    %1419 = vrot.lane.b32.xlu0 %v940, 112
    %v1420 = vpop.permute.xlu0 %1419
    %v1422 = vsel %vm313, %v1420, 0
    %1424 = vmatprep.subr.bf16.mxu0 0
    %1425 = vmatpush1.bf16.xpose.msra.mxu0 %v1262
    %1426 = vmatprep.subr.bf16.mxu0 0
    %1427 = vmatpush1.bf16.xpose.msra.mxu0 0
    %1428 = vmatprep.subr.bf16.mxu0 0
    %1429 = vmatpush1.bf16.xpose.msra.mxu0 0
    %1430 = vmatprep.subr.bf16.mxu0 0
    %1431 = vmatpush1.bf16.xpose.msra.mxu0 0
    %1432 = vmatprep.subr.bf16.mxu0 0
    %1433 = vmatpush1.bf16.xpose.msra.mxu0 0
    %1434 = vmatprep.subr.bf16.mxu0 0
    %1435 = vmatpush1.bf16.xpose.msra.mxu0 0
    %1436 = vmatprep.subr.bf16.mxu0 0
    %1437 = vmatpush1.bf16.xpose.msra.mxu0 0
    %1438 = vmatprep.subr.bf16.mxu0 0
    %1439 = vmatpush1.bf16.xpose.msra.mxu0 0
    %1440 = vmatprep.subr.bf16.mxu0 0
    %1441 = vmatpush1.bf16.xpose.msra.mxu0 0
    %1442 = vmatprep.subr.bf16.mxu0 0
    %1443 = vmatpush1.bf16.xpose.msra.mxu0 0
    %1444 = vmatprep.subr.bf16.mxu0 0
    %1445 = vmatpush1.bf16.xpose.msra.mxu0 0
    %1446 = vmatprep.subr.bf16.mxu0 0
    %1447 = vmatpush1.bf16.xpose.msra.mxu0 0
    %1448 = vmatprep.subr.bf16.mxu0 0
    %1449 = vmatpush1.bf16.xpose.msra.mxu0 0
    %1450 = vmatprep.subr.bf16.mxu0 0
    %1451 = vmatpush1.bf16.xpose.msra.mxu0 0
    %1452 = vmatprep.subr.bf16.mxu0 0
    %1453 = vmatpush1.bf16.xpose.msra.mxu0 0
    %1454 = vmatprep.subr.bf16.mxu0 0
    %1455 = vmatpush1.bf16.xpose.msra.mxu0 0
    %1456 = vmatprep.mubr.bf16.mxu0 0
    %1457 = vmatmul.mubr.bf16.gmra.mrb[0].mxu0 %v1422
    %v1458 = vpop.f32.mrb[0].mxu0
    %v1459 = vadd.f32 0.0, %v1458
    %v1460 = vpop.f32.mrb[0].mxu0
    %v1461 = vpop.f32.mrb[0].mxu0
    %v1462 = vpop.f32.mrb[0].mxu0
    %1463 = vdwg.mxu0
    %1464 = vrot.lane.b32.xlu0 %v939, 80
    %v1465 = vpop.permute.xlu0 %1464
    %v1467 = vsel %vm313, %v1465, 0
    %1469 = vmatprep.subr.bf16.mxu0 0
    %1470 = vmatpush1.bf16.xpose.msra.mxu0 %v1312
    %1471 = vmatprep.subr.bf16.mxu0 0
    %1472 = vmatpush1.bf16.xpose.msra.mxu0 0
    %1473 = vmatprep.subr.bf16.mxu0 0
    %1474 = vmatpush1.bf16.xpose.msra.mxu0 0
    %1475 = vmatprep.subr.bf16.mxu0 0
    %1476 = vmatpush1.bf16.xpose.msra.mxu0 0
    %1477 = vmatprep.subr.bf16.mxu0 0
    %1478 = vmatpush1.bf16.xpose.msra.mxu0 0
    %1479 = vmatprep.subr.bf16.mxu0 0
    %1480 = vmatpush1.bf16.xpose.msra.mxu0 0
    %1481 = vmatprep.subr.bf16.mxu0 0
    %1482 = vmatpush1.bf16.xpose.msra.mxu0 0
    %1483 = vmatprep.subr.bf16.mxu0 0
    %1484 = vmatpush1.bf16.xpose.msra.mxu0 0
    %1485 = vmatprep.subr.bf16.mxu0 0
    %1486 = vmatpush1.bf16.xpose.msra.mxu0 0
    %1487 = vmatprep.subr.bf16.mxu0 0
    %1488 = vmatpush1.bf16.xpose.msra.mxu0 0
    %1489 = vmatprep.subr.bf16.mxu0 0
    %1490 = vmatpush1.bf16.xpose.msra.mxu0 0
    %1491 = vmatprep.subr.bf16.mxu0 0
    %1492 = vmatpush1.bf16.xpose.msra.mxu0 0
    %1493 = vmatprep.subr.bf16.mxu0 0
    %1494 = vmatpush1.bf16.xpose.msra.mxu0 0
    %1495 = vmatprep.subr.bf16.mxu0 0
    %1496 = vmatpush1.bf16.xpose.msra.mxu0 0
    %1497 = vmatprep.subr.bf16.mxu0 0
    %1498 = vmatpush1.bf16.xpose.msra.mxu0 0
    %1499 = vmatprep.subr.bf16.mxu0 0
    %1500 = vmatpush1.bf16.xpose.msra.mxu0 0
    %1501 = vmatprep.mubr.bf16.mxu0 0
    %1502 = vmatmul.mubr.bf16.gmra.mrb[0].mxu0 %v1467
    %v1503 = vpop.f32.mrb[0].mxu0
    %v1504 = vadd.f32 %v1459, %v1503
    %v1505 = vpop.f32.mrb[0].mxu0
    %v1506 = vpop.f32.mrb[0].mxu0
    %v1507 = vpop.f32.mrb[0].mxu0
    %1508 = vdwg.mxu0
    %v1509 = vsel %vm409, %v1504, -inf
    %1510 = vmax.xlane.f32.xlu0 %v1509
    %v1511 = vpop.xlane.xlu0 %1510
    %v1512 = vsub.f32 %v1504, %v1511
    %v1513 = vmul.f32 %v1512, 1.442695
    %v1514 = vpow.pop %v1513
    %v1515 = vsel %vm409, %v1514, 0.0
    %1516 = vadd.xlane.f32.xlu0 %v1515
    %v1517 = vpop.xlane.xlu0 %1516
    %v1518 = vrcp.pop %v1517
    %v1519 = vmul.f32 %v1514, %v1518
    %v1520 = vpack.c.bf16 %v1519, %v1519
    %v1522 = vsel %vm409, %v1520, 0
    %1524 = vmatprep.subr.bf16.mxu0 0
    %1525 = vmatpush1.bf16.msra.mxu0 %v1372
    %1526 = vmatprep.subr.bf16.mxu0 0
    %1527 = vmatpush1.bf16.msra.mxu0 0
    %1528 = vmatprep.subr.bf16.mxu0 0
    %1529 = vmatpush1.bf16.msra.mxu0 0
    %1530 = vmatprep.subr.bf16.mxu0 0
    %1531 = vmatpush1.bf16.msra.mxu0 0
    %1532 = vmatprep.subr.bf16.mxu0 0
    %1533 = vmatpush1.bf16.msra.mxu0 0
    %1534 = vmatprep.subr.bf16.mxu0 0
    %1535 = vmatpush1.bf16.msra.mxu0 0
    %1536 = vmatprep.subr.bf16.mxu0 0
    %1537 = vmatpush1.bf16.msra.mxu0 0
    %1538 = vmatprep.subr.bf16.mxu0 0
    %1539 = vmatpush1.bf16.msra.mxu0 0
    %1540 = vmatprep.subr.bf16.mxu0 0
    %1541 = vmatpush1.bf16.msra.mxu0 0
    %1542 = vmatprep.subr.bf16.mxu0 0
    %1543 = vmatpush1.bf16.msra.mxu0 0
    %1544 = vmatprep.subr.bf16.mxu0 0
    %1545 = vmatpush1.bf16.msra.mxu0 0
    %1546 = vmatprep.subr.bf16.mxu0 0
    %1547 = vmatpush1.bf16.msra.mxu0 0
    %1548 = vmatprep.subr.bf16.mxu0 0
    %1549 = vmatpush1.bf16.msra.mxu0 0
    %1550 = vmatprep.subr.bf16.mxu0 0
    %1551 = vmatpush1.bf16.msra.mxu0 0
    %1552 = vmatprep.subr.bf16.mxu0 0
    %1553 = vmatpush1.bf16.msra.mxu0 0
    %1554 = vmatprep.subr.bf16.mxu0 0
    %1555 = vmatpush1.bf16.msra.mxu0 0
    %1556 = vmatprep.mubr.bf16.mxu0 0
    %1557 = vmatmul.mubr.bf16.gmra.mrb[0].mxu0 %v1522
    %v1558 = vpop.f32.mrb[0].mxu0
    %v1559 = vadd.f32 0.0, %v1558
    %v1560 = vpop.f32.mrb[0].mxu0
    %v1561 = vpop.f32.mrb[0].mxu0
    %v1562 = vpop.f32.mrb[0].mxu0
    %1563 = vdwg.mxu0
    %1565 = vrot.lane.b32.xlu0 %v1559, 96
    %v1566 = vpop.permute.xlu0 %1565
    %1568 = vst.msk [vmem:[#allocation2 + $0x8] sm:$0xff] %vm937, %v1566
    %v1569 = vld [vmem:[#allocation2] sm:$0xff]
    %v1570 = vld [vmem:[#allocation2 + $0x8] sm:$0xff]
    %v1571 = vpack.c.bf16 %v1570, %v1569
    %v1572 = vld [vmem:[#allocation8] sm:$0xf]
    %v1573 = vld [vmem:[#allocation8 + $0x4] sm:$0xf]
    %v1574 = vld [vmem:[#allocation8 + $0x8] sm:$0xf]
    %v1575 = vld [vmem:[#allocation8 + $0xc] sm:$0xf]
    %v1576 = vld [vmem:[#allocation8 + $0x10] sm:$0xf]
    %v1577 = vld [vmem:[#allocation8 + $0x14] sm:$0xf]
    %v1578 = vld [vmem:[#allocation8 + $0x18] sm:$0xf]
    %v1579 = vld [vmem:[#allocation8 + $0x1c] sm:$0xf]
    %v1580 = vld [vmem:[#allocation8 + $0x20] sm:$0xf]
    %v1581 = vld [vmem:[#allocation8 + $0x24] sm:$0xf]
    %v1582 = vld [vmem:[#allocation8 + $0x28] sm:$0xf]
    %v1583 = vld [vmem:[#allocation8 + $0x2c] sm:$0xf]
    %v1584 = vld [vmem:[#allocation8 + $0x30] sm:$0xf]
    %v1585 = vld [vmem:[#allocation8 + $0x34] sm:$0xf]
    %v1586 = vld [vmem:[#allocation8 + $0x38] sm:$0xf]
    %v1587 = vld [vmem:[#allocation8 + $0x3c] sm:$0xf]
    %v1604 = vunpack.c.l.b16 %v1572
    %v1605 = vunpack.c.l.b16 %v1573
    %v1606 = vunpack.c.l.b16 %v1574
    %v1607 = vunpack.c.l.b16 %v1575
    %v1608 = vunpack.c.l.b16 %v1576
    %v1609 = vunpack.c.l.b16 %v1577
    %v1610 = vunpack.c.l.b16 %v1578
    %v1611 = vunpack.c.l.b16 %v1579
    %v1612 = vunpack.c.l.b16 %v1580
    %v1613 = vunpack.c.l.b16 %v1581
    %v1614 = vunpack.c.l.b16 %v1582
    %v1615 = vunpack.c.l.b16 %v1583
    %v1616 = vunpack.c.l.b16 %v1584
    %v1617 = vunpack.c.l.b16 %v1585
    %v1618 = vunpack.c.l.b16 %v1586
    %v1619 = vunpack.c.l.b16 %v1587
    %v1620 = vpack.c.b16 %v1605, %v1604
    %v1621 = vpack.c.b16 %v1607, %v1606
    %v1622 = vpack.c.b16 %v1609, %v1608
    %v1623 = vpack.c.b16 %v1611, %v1610
    %v1624 = vpack.c.b16 %v1613, %v1612
    %v1625 = vpack.c.b16 %v1615, %v1614
    %v1626 = vpack.c.b16 %v1617, %v1616
    %v1627 = vpack.c.b16 %v1619, %v1618
    %1636 = vmatprep.subr.bf16.mxu0 0
    %1637 = vmatpush1.bf16.msra.mxu0 %v1620
    %1638 = vmatprep.subr.bf16.mxu0 0
    %1639 = vmatpush1.bf16.msra.mxu0 %v1621
    %1640 = vmatprep.subr.bf16.mxu0 0
    %1641 = vmatpush1.bf16.msra.mxu0 %v1622
    %1642 = vmatprep.subr.bf16.mxu0 0
    %1643 = vmatpush1.bf16.msra.mxu0 %v1623
    %1644 = vmatprep.subr.bf16.mxu0 0
    %1645 = vmatpush1.bf16.msra.mxu0 %v1624
    %1646 = vmatprep.subr.bf16.mxu0 0
    %1647 = vmatpush1.bf16.msra.mxu0 %v1625
    %1648 = vmatprep.subr.bf16.mxu0 0
    %1649 = vmatpush1.bf16.msra.mxu0 %v1626
    %1650 = vmatprep.subr.bf16.mxu0 0
    %1651 = vmatpush1.bf16.msra.mxu0 %v1627
    %1652 = vmatprep.subr.bf16.mxu0 0
    %1653 = vmatpush1.bf16.msra.mxu0 0
    %1654 = vmatprep.subr.bf16.mxu0 0
    %1655 = vmatpush1.bf16.msra.mxu0 0
    %1656 = vmatprep.subr.bf16.mxu0 0
    %1657 = vmatpush1.bf16.msra.mxu0 0
    %1658 = vmatprep.subr.bf16.mxu0 0
    %1659 = vmatpush1.bf16.msra.mxu0 0
    %1660 = vmatprep.subr.bf16.mxu0 0
    %1661 = vmatpush1.bf16.msra.mxu0 0
    %1662 = vmatprep.subr.bf16.mxu0 0
    %1663 = vmatpush1.bf16.msra.mxu0 0
    %1664 = vmatprep.subr.bf16.mxu0 0
    %1665 = vmatpush1.bf16.msra.mxu0 0
    %1666 = vmatprep.subr.bf16.mxu0 0
    %1667 = vmatpush1.bf16.msra.mxu0 0
    %1668 = vmatprep.mubr.bf16.mxu0 0
    %1669 = vmatmul.mubr.bf16.gmra.mrb[0].mxu0 %v1571
    %v1670 = vpop.f32.mrb[0].mxu0
    %v1671 = vadd.f32 0.0, %v1670
    %v1672 = vpop.f32.mrb[0].mxu0
    %v1673 = vpop.f32.mrb[0].mxu0
    %v1674 = vadd.f32 0.0, %v1673
    %v1675 = vpop.f32.mrb[0].mxu0
    %1676 = vdwg.mxu0
    %1677 = vst [vmem:[#allocation12] sm:$0xff] %v1671
    %1678 = vst [vmem:[#allocation12 + $0x8] sm:$0xff] %v1674
    // Predicated region
    $region42: #{tpu_custom_call.1} parent=1 // pred_check
      _
    $region43: #{tpu_custom_call.1} parent=1 // pred_check_branch
      %1680 = sbr.rel (0) target = $region45
    $region44: #{tpu_custom_call.1} parent=1 // pred_region
      %s1682 = ssub.s32 256, 256
      %1683 = vsyncadd [#allocation5], %s1682
      %s1684 = sshll.u32 [#allocation12], 4
      %s1685 = int_to_ptr.vmem [resolvable:$true] %s1684
      %1690 = dma.vmem_to_hbm [thread:$0]  %s1685, 256, %s5, [#allocation5], 128, 128, 8
    $region45: #{tpu_custom_call.1} parent=1 // pred_fallthru
      _
    // Predicated region
    $region46: #{tpu_custom_call.1} parent=1 // pred_check
      _
    $region47: #{tpu_custom_call.1} parent=1 // pred_check_branch
      %1692 = sbr.rel (0) target = $region49
    $region48: #{tpu_custom_call.1} parent=1 // pred_region
      %1693 = dma.done [#allocation5], 256
    $region49: #{tpu_custom_call.1} parent=1 // pred_fallthru
      _
    %1694 = vsyncpa [#allocation4], 1
    %1695 = vsyncpa [#allocation7], 1
    %1696 = vsyncpa [#allocation10], 1
    %1697 = vsyncpa [#allocation5], 1

</llo_original>
